<compile_context>
chip_gen: v7x
topology: tpu7x:2x2x1
jax: 0.10.0
libtpu: 0.0.40
codegen_flags: <defaults>
</compile_context>

<pallas_src>
import math
import functools

import jax
import jax.numpy as jnp
import numpy as np
from jax import lax
from jax.experimental import pallas as pl
from jax.experimental.pallas import tpu as pltpu


def _layer_norm(x, g, b, eps=1e-6):
    mu = jnp.mean(x, axis=-1, keepdims=True)
    var = jnp.mean((x - mu) ** 2, axis=-1, keepdims=True)
    return (x - mu) * lax.rsqrt(var + eps) * g + b


def _softmax(x, axis):
    m = jnp.max(x, axis=axis, keepdims=True)
    e = jnp.exp(x - m)
    return e / jnp.sum(e, axis=axis, keepdims=True)


# ----------------------------- Pallas kernel (one batch x one head-group per step) -----
def _mha_kernel(xq_ref, xk_ref,
                ln_g_ref, ln_b_ref,
                wqg_ref, wkv_ref, bg_ref, wog_ref, bo_ref,
                out_ref,
                lnq_scr, lnk_scr,
                *, d_k, G):
    g = pl.program_id(1)
    gdk = G * d_k

    # LayerNorm once per batch block (group 0); reused by every group step.
    @pl.when(g == 0)
    def _():
        gamma = ln_g_ref[...]
        beta = ln_b_ref[...]
        lnq_scr[...] = _layer_norm(xq_ref[0], gamma, beta).astype(jnp.bfloat16)
        lnk_scr[...] = _layer_norm(xk_ref[0], gamma, beta).astype(jnp.bfloat16)

    ln_q_b = lnq_scr[...]                       # (Lq, D) bf16
    ln_k_b = lnk_scr[...]                       # (Lk, D) bf16

    # Fused wide projections for this head group (f32 accumulation on MXU).
    qg = jnp.dot(ln_q_b, wqg_ref[0], preferred_element_type=jnp.float32)   # (Lq, 2*G*d_k)
    kv = jnp.dot(ln_k_b, wkv_ref[0], preferred_element_type=jnp.float32)   # (Lk, 2*G*d_k)

    q_all = qg[:, :gdk].astype(jnp.bfloat16)     # (Lq, G*d_k)  (1/sqrt(d_k) folded into Wq)
    gate = jax.nn.sigmoid(qg[:, gdk:] + bg_ref[0])                          # (Lq, G*d_k) f32
    k_all = kv[:, :gdk].astype(jnp.bfloat16)     # (Lk, G*d_k)
    v_all = kv[:, gdk:].astype(jnp.bfloat16)     # (Lk, G*d_k)

    # Per-head dual-softmax attention (static unrolled loop over the G group heads).
    o_parts = []
    for h in range(G):
        qh = q_all[:, h * d_k:(h + 1) * d_k]
        kh = k_all[:, h * d_k:(h + 1) * d_k]
        vh = v_all[:, h * d_k:(h + 1) * d_k]

        # Scores: contract last dims directly (no explicit transpose of K).
        a = lax.dot_general(qh, kh,
                            dimension_numbers=(((1,), (1,)), ((), ())),
                            preferred_element_type=jnp.float32)             # (Lq, Lk)

        # Dual softmax; normalization via per-row / per-column vector reciprocals.
        m_r = jnp.max(a, axis=-1, keepdims=True)      # over keys     (Lq, 1)
        m_c = jnp.max(a, axis=0, keepdims=True)       # over queries  (1, Lk)
        e_r = jnp.exp(a - m_r)
        e_c = jnp.exp(a - m_c)
        r_r = pl.reciprocal(jnp.sum(e_r, axis=-1, keepdims=True), approx=True)   # (Lq, 1)
        r_c = pl.reciprocal(jnp.sum(e_c, axis=0, keepdims=True), approx=True)    # (1, Lk)
        p = (e_r * r_r) * (e_c * r_c)                                            # (Lq, Lk)

        o_parts.append(jnp.dot(p.astype(jnp.bfloat16), vh,
                               preferred_element_type=jnp.float32))              # (Lq, d_k)

    o_all = o_parts[0] if G == 1 else jnp.concatenate(o_parts, axis=-1)          # (Lq, G*d_k)

    # Gated, group-wide output projection (K = G*d_k contraction).
    contrib = jnp.dot((o_all * gate).astype(jnp.bfloat16), wog_ref[0],
                      preferred_element_type=jnp.float32)                        # (Lq, D)

    # Accumulate directly into the VMEM-resident output block; bias added once.
    @pl.when(g == 0)
    def _():
        out_ref[0] = contrib + bo_ref[...]

    @pl.when(g > 0)
    def _():
        out_ref[0] = out_ref[0] + contrib


# ----------------------------- host wrapper -------------------------------------------
def multi_head_attention(x_q, x_k, params, heads, head_group=None):
    B, Lq, D = x_q.shape
    Lk = x_k.shape[1]
    d_k = D // heads

    # Head-group size: smallest divisor of `heads` with G*d_k >= 128 (fills a
    # 128-wide MXU tile; pass head_group explicitly to target 256 on v6e/v7x).
    if head_group is None:
        G = heads
        for cand in range(1, heads + 1):
            if heads % cand == 0 and cand * d_k >= 128:
                G = cand
                break
    else:
        G = head_group
    assert heads % G == 0
    n_groups = heads // G
    gdk = G * d_k

    # ---- host-side layout plumbing (pure layout, no extra runtime compute) ----
    scale = 1.0 / math.sqrt(d_k)

    def per_head_cols(w):                       # (D, D) -> (heads, D, d_k)
        return w.reshape(D, heads, d_k).transpose(1, 0, 2)

    def group_cols(w_h):                        # (heads, D, d_k) -> (n_groups, D, G*d_k)
        return w_h.reshape(n_groups, G, D, d_k).transpose(0, 2, 1, 3).reshape(n_groups, D, gdk)

    wq_h = per_head_cols(params["wq"] * scale)  # fold 1/sqrt(d_k) into Wq
    wg_h = per_head_cols(params["wg"])
    wk_h = per_head_cols(params["wk"])
    wv_h = per_head_cols(params["wv"])

    wqg = jnp.concatenate([group_cols(wq_h), group_cols(wg_h)], axis=-1).astype(jnp.bfloat16)
    wkv = jnp.concatenate([group_cols(wk_h), group_cols(wv_h)], axis=-1).astype(jnp.bfloat16)
    wog = params["wo"].reshape(heads, d_k, D).reshape(n_groups, gdk, D).astype(jnp.bfloat16)
    bg_g = params["bg"].reshape(heads, d_k).reshape(n_groups, 1, gdk)          # f32
    ln_g, ln_b, bo = params["ln_g"], params["ln_b"], params["bo"]

    kernel = functools.partial(_mha_kernel, d_k=d_k, G=G)

    in_specs = [
        pl.BlockSpec((1, Lq, D), lambda b, g: (b, 0, 0)),       # x_q
        pl.BlockSpec((1, Lk, D), lambda b, g: (b, 0, 0)),       # x_k
        pl.BlockSpec((1, D), lambda b, g: (0, 0)),              # ln_g
        pl.BlockSpec((1, D), lambda b, g: (0, 0)),              # ln_b
        pl.BlockSpec((1, D, 2 * gdk), lambda b, g: (g, 0, 0)),  # [Wq|Wg] per group
        pl.BlockSpec((1, D, 2 * gdk), lambda b, g: (g, 0, 0)),  # [Wk|Wv] per group
        pl.BlockSpec((1, 1, gdk), lambda b, g: (g, 0, 0)),      # bg per group
        pl.BlockSpec((1, gdk, D), lambda b, g: (g, 0, 0)),      # Wo rows per group
        pl.BlockSpec((1, D), lambda b, g: (0, 0)),              # bo
    ]

    # Derive a VMEM budget from the actual block sizes (double-buffered blocks +
    # persistent scratch + live softmax temporaries), capped at 75% of physical VMEM.
    block_bytes = (
        Lq * D * 4 + Lk * D * 4                 # x_q, x_k
        + 2 * D * 4                             # ln_g, ln_b
        + 2 * (D * 2 * gdk * 2)                 # wqg, wkv (bf16)
        + gdk * 4                               # bg
        + gdk * D * 2                           # wog (bf16)
        + D * 4                                 # bo
        + Lq * D * 4                            # out
    )
    vmem_est = 2 * block_bytes                  # double buffering
    vmem_est += (Lq * D + Lk * D) * 2           # bf16 LayerNorm scratch
    vmem_est += 8 * Lq * Lk * 4                 # live (Lq,Lk) f32 softmax temporaries
    vmem_est = int(vmem_est * 1.5) + (4 << 20)  # headroom for compiler internals
    try:
        phys_vmem = int(pltpu.get_tpu_info().vmem_capacity_bytes)
    except Exception:
        phys_vmem = 128 * 1024 * 1024
    vmem_limit = max(32 << 20, min(vmem_est, int(phys_vmem * 0.75)))

    return pl.pallas_call(
        kernel,
        out_shape=jax.ShapeDtypeStruct((B, Lq, D), jnp.float32),
        grid=(B, n_groups),
        in_specs=in_specs,
        out_specs=pl.BlockSpec((1, Lq, D), lambda b, g: (b, 0, 0)),
        scratch_shapes=[
            pltpu.VMEM((Lq, D), jnp.bfloat16),   # LayerNorm(x_q), bf16
            pltpu.VMEM((Lk, D), jnp.bfloat16),   # LayerNorm(x_k), bf16
        ],
        compiler_params=pltpu.CompilerParams(
            dimension_semantics=("parallel", "arbitrary"),
            vmem_limit_bytes=vmem_limit,
        ),
    )(x_q, x_k, ln_g, ln_b, wqg, wkv, bg_g, wog, bo)


# ----------------------------- deterministic parameter init ----------------------------
def init_params(key, d_model):
    ks = jax.random.split(key, 8)

    def xavier(k, shape):
        limit = math.sqrt(6.0 / (shape[0] + shape[1]))
        return jax.random.uniform(k, shape, jnp.float32, -limit, limit)

    # NOTE: the module's reset_parameters() sets gating.weight=0, gating.bias=1 and
    # LayerNorm to (1, 0). Mildly randomized values are used here so the test actually
    # exercises the gating / LayerNorm affine code paths; forward semantics are identical.
    return dict(
        ln_g=1.0 + 0.1 * jax.random.normal(ks[0], (1, d_model), jnp.float32),
        ln_b=0.1 * jax.random.normal(ks[1], (1, d_model), jnp.float32),
        wq=xavier(ks[2], (d_model, d_model)),
        wk=xavier(ks[3], (d_model, d_model)),
        wv=xavier(ks[4], (d_model, d_model)),
        wg=xavier(ks[5], (d_model, d_model)),
        bg=jnp.ones((1, d_model), jnp.float32),
        wo=xavier(ks[6], (d_model, d_model)),
        bo=0.1 * jax.random.normal(ks[7], (1, d_model), jnp.float32),
    )


# ----------------------------- pure-JAX f32 reference -----------------------------------
def reference_mha(x_q, x_k, p, heads):
    B, Lq, D = x_q.shape
    Lk = x_k.shape[1]
    d_k = D // heads
    hp = lax.Precision.HIGHEST
    ln_q = _layer_norm(x_q, p["ln_g"], p["ln_b"])
    ln_k = _layer_norm(x_k, p["ln_g"], p["ln_b"])
    q = jnp.dot(ln_q, p["wq"], precision=hp)
    k = jnp.dot(ln_k, p["wk"], precision=hp)
    v = jnp.dot(ln_k, p["wv"], precision=hp)
    qh = q.reshape(B, Lq, heads, d_k).transpose(0, 2, 1, 3)
    kh = k.reshape(B, Lk, heads, d_k).transpose(0, 2, 1, 3)
    vh = v.reshape(B, Lk, heads, d_k).transpose(0, 2, 1, 3)
    a = jnp.einsum("bhqd,bhkd->bhqk", qh, kh, precision=hp) / math.sqrt(d_k)
    a = _softmax(a, -1) * _softmax(a, -2)
    o = jnp.einsum("bhqk,bhkd->bhqd", a, vh, precision=hp)
    o = o.transpose(0, 2, 1, 3).reshape(B, Lq, D)
    gate = jax.nn.sigmoid(jnp.dot(ln_q, p["wg"], precision=hp) + p["bg"])
    return jnp.dot(o * gate, p["wo"], precision=hp) + p["bo"]


if __name__ == "__main__":
    B, Lq, Lk = 2, 8, 16
    d_model, heads = 32, 4

    key = jax.random.PRNGKey(0)
    kq, kk, kp = jax.random.split(key, 3)
    x_q = jax.random.normal(kq, (B, Lq, d_model), jnp.float32)
    x_k = jax.random.normal(kk, (B, Lk, d_model), jnp.float32)
    params = init_params(kp, d_model)

    out = multi_head_attention(x_q, x_k, params, heads)
    out = jax.block_until_ready(out)

    ref = jax.block_until_ready(reference_mha(x_q, x_k, params, heads))

    np.testing.assert_allclose(np.asarray(out), np.asarray(ref), rtol=2e-2, atol=2e-2)
    print("KERNEL_OK")
</pallas_src>

<mosaic_0001>
module attributes {stable_mosaic.version = 11 : i64} {
  func.func @_mha_kernel(%arg0: i32, %arg1: i32, %arg2: memref<1x8x32xf32, #tpu.memory_space<vmem>>, %arg3: memref<1x16x32xf32, #tpu.memory_space<vmem>>, %arg4: memref<1x32xf32, #tpu.memory_space<vmem>>, %arg5: memref<1x32xf32, #tpu.memory_space<vmem>>, %arg6: memref<1x32x64xbf16, #tpu.memory_space<vmem>>, %arg7: memref<1x32x64xbf16, #tpu.memory_space<vmem>>, %arg8: memref<1x1x32xf32, #tpu.memory_space<vmem>>, %arg9: memref<1x32x32xbf16, #tpu.memory_space<vmem>>, %arg10: memref<1x32xf32, #tpu.memory_space<vmem>>, %arg11: memref<1x8x32xf32, #tpu.memory_space<vmem>>, %arg12: memref<8x32xbf16, #tpu.memory_space<vmem>>, %arg13: memref<16x32xbf16, #tpu.memory_space<vmem>>) attributes {dimension_semantics = [#tpu.dimension_semantics<parallel>, #tpu.dimension_semantics<arbitrary>], iteration_bounds = array<i64: 2, 1>, scalar_prefetch = 0 : i64, scratch_operands = 2 : i64, tpu.core_type = #tpu.core_type<tc>, window_params = [{transform_indices = @transform_0, window_bounds = array<i64: 1, 8, 32>}, {transform_indices = @transform_1, window_bounds = array<i64: 1, 16, 32>}, {pipeline_mode = #tpu.pipeline_mode<synchronous>, transform_indices = @transform_2, window_bounds = array<i64: 1, 32>}, {pipeline_mode = #tpu.pipeline_mode<synchronous>, transform_indices = @transform_3, window_bounds = array<i64: 1, 32>}, {transform_indices = @transform_4, window_bounds = array<i64: 1, 32, 64>}, {transform_indices = @transform_5, window_bounds = array<i64: 1, 32, 64>}, {transform_indices = @transform_6, window_bounds = array<i64: 1, 1, 32>}, {transform_indices = @transform_7, window_bounds = array<i64: 1, 32, 32>}, {pipeline_mode = #tpu.pipeline_mode<synchronous>, transform_indices = @transform_8, window_bounds = array<i64: 1, 32>}, {transform_indices = @transform_9, window_bounds = array<i64: 1, 8, 32>}]} {
    %c0_i32 = arith.constant 0 : i32
    %0 = arith.cmpi eq, %arg1, %c0_i32 : i32
    %1 = arith.extui %0 : i1 to i32
    %c0_i32_0 = arith.constant 0 : i32
    %2 = arith.cmpi ne, %1, %c0_i32_0 : i32
    scf.if %2 {
      %c0_47 = arith.constant 0 : index
      %c0_48 = arith.constant 0 : index
      %147 = vector.load %arg4[%c0_47, %c0_48] : memref<1x32xf32, #tpu.memory_space<vmem>>, vector<1x32xf32>
      %c0_49 = arith.constant 0 : index
      %c0_50 = arith.constant 0 : index
      %148 = vector.load %arg5[%c0_49, %c0_50] : memref<1x32xf32, #tpu.memory_space<vmem>>, vector<1x32xf32>
      %c0_51 = arith.constant 0 : index
      %c0_52 = arith.constant 0 : index
      %c0_53 = arith.constant 0 : index
      %149 = vector.load %arg2[%c0_51, %c0_52, %c0_53] : memref<1x8x32xf32, #tpu.memory_space<vmem>>, vector<1x8x32xf32>
      %150 = vector.shape_cast %149 : vector<1x8x32xf32> to vector<8x32xf32>
      %cst_54 = arith.constant dense<0.000000e+00> : vector<8xf32>
      %151 = vector.multi_reduction <add>, %150, %cst_54 [1] : vector<8x32xf32> to vector<8xf32>
      %152 = vector.shape_cast %151 : vector<8xf32> to vector<8x1xf32>
      %cst_55 = arith.constant 3.200000e+01 : f32
      %153 = vector.broadcast %cst_55 : f32 to vector<8x1xf32>
      %154 = arith.divf %152, %153 : vector<8x1xf32>
      %155 = vector.broadcast %154 : vector<8x1xf32> to vector<8x32xf32>
      %156 = arith.subf %150, %155 : vector<8x32xf32>
      %157 = arith.mulf %156, %156 : vector<8x32xf32>
      %cst_56 = arith.constant dense<0.000000e+00> : vector<8xf32>
      %158 = vector.multi_reduction <add>, %157, %cst_56 [1] : vector<8x32xf32> to vector<8xf32>
      %159 = vector.shape_cast %158 : vector<8xf32> to vector<8x1xf32>
      %cst_57 = arith.constant 3.200000e+01 : f32
      %160 = vector.broadcast %cst_57 : f32 to vector<8x1xf32>
      %161 = arith.divf %159, %160 : vector<8x1xf32>
      %162 = vector.broadcast %154 : vector<8x1xf32> to vector<8x32xf32>
      %163 = arith.subf %150, %162 : vector<8x32xf32>
      %cst_58 = arith.constant 9.99999997E-7 : f32
      %164 = vector.broadcast %cst_58 : f32 to vector<8x1xf32>
      %165 = arith.addf %161, %164 : vector<8x1xf32>
      %166 = math.rsqrt %165 : vector<8x1xf32>
      %167 = vector.broadcast %166 : vector<8x1xf32> to vector<8x32xf32>
      %168 = arith.mulf %163, %167 : vector<8x32xf32>
      %169 = vector.broadcast %147 : vector<1x32xf32> to vector<8x32xf32>
      %170 = arith.mulf %168, %169 : vector<8x32xf32>
      %171 = vector.broadcast %148 : vector<1x32xf32> to vector<8x32xf32>
      %172 = arith.addf %170, %171 : vector<8x32xf32>
      %173 = arith.truncf %172 : vector<8x32xf32> to vector<8x32xbf16>
      %c0_59 = arith.constant 0 : index
      %c0_60 = arith.constant 0 : index
      %174 = vector.load %arg12[%c0_59, %c0_60] : memref<8x32xbf16, #tpu.memory_space<vmem>>, vector<8x32xbf16>
      tpu.vector_store %arg12[%c0_59, %c0_60], %173 {strides = array<i32>} : memref<8x32xbf16, #tpu.memory_space<vmem>>, vector<8x32xbf16>,
      %c0_61 = arith.constant 0 : index
      %c0_62 = arith.constant 0 : index
      %c0_63 = arith.constant 0 : index
      %175 = vector.load %arg3[%c0_61, %c0_62, %c0_63] : memref<1x16x32xf32, #tpu.memory_space<vmem>>, vector<1x16x32xf32>
      %176 = vector.shape_cast %175 : vector<1x16x32xf32> to vector<16x32xf32>
      %cst_64 = arith.constant dense<0.000000e+00> : vector<16xf32>
      %177 = vector.multi_reduction <add>, %176, %cst_64 [1] : vector<16x32xf32> to vector<16xf32>
      %178 = vector.shape_cast %177 : vector<16xf32> to vector<16x1xf32>
      %cst_65 = arith.constant 3.200000e+01 : f32
      %179 = vector.broadcast %cst_65 : f32 to vector<16x1xf32>
      %180 = arith.divf %178, %179 : vector<16x1xf32>
      %181 = vector.broadcast %180 : vector<16x1xf32> to vector<16x32xf32>
      %182 = arith.subf %176, %181 : vector<16x32xf32>
      %183 = arith.mulf %182, %182 : vector<16x32xf32>
      %cst_66 = arith.constant dense<0.000000e+00> : vector<16xf32>
      %184 = vector.multi_reduction <add>, %183, %cst_66 [1] : vector<16x32xf32> to vector<16xf32>
      %185 = vector.shape_cast %184 : vector<16xf32> to vector<16x1xf32>
      %cst_67 = arith.constant 3.200000e+01 : f32
      %186 = vector.broadcast %cst_67 : f32 to vector<16x1xf32>
      %187 = arith.divf %185, %186 : vector<16x1xf32>
      %188 = vector.broadcast %180 : vector<16x1xf32> to vector<16x32xf32>
      %189 = arith.subf %176, %188 : vector<16x32xf32>
      %cst_68 = arith.constant 9.99999997E-7 : f32
      %190 = vector.broadcast %cst_68 : f32 to vector<16x1xf32>
      %191 = arith.addf %187, %190 : vector<16x1xf32>
      %192 = math.rsqrt %191 : vector<16x1xf32>
      %193 = vector.broadcast %192 : vector<16x1xf32> to vector<16x32xf32>
      %194 = arith.mulf %189, %193 : vector<16x32xf32>
      %195 = vector.broadcast %147 : vector<1x32xf32> to vector<16x32xf32>
      %196 = arith.mulf %194, %195 : vector<16x32xf32>
      %197 = vector.broadcast %148 : vector<1x32xf32> to vector<16x32xf32>
      %198 = arith.addf %196, %197 : vector<16x32xf32>
      %199 = arith.truncf %198 : vector<16x32xf32> to vector<16x32xbf16>
      %c0_69 = arith.constant 0 : index
      %c0_70 = arith.constant 0 : index
      %200 = vector.load %arg13[%c0_69, %c0_70] : memref<16x32xbf16, #tpu.memory_space<vmem>>, vector<16x32xbf16>
      tpu.vector_store %arg13[%c0_69, %c0_70], %199 {strides = array<i32>} : memref<16x32xbf16, #tpu.memory_space<vmem>>, vector<16x32xbf16>,
    } else {
    }
    %c0 = arith.constant 0 : index
    %c0_1 = arith.constant 0 : index
    %3 = vector.load %arg12[%c0, %c0_1] : memref<8x32xbf16, #tpu.memory_space<vmem>>, vector<8x32xbf16>
    %c0_2 = arith.constant 0 : index
    %c0_3 = arith.constant 0 : index
    %4 = vector.load %arg13[%c0_2, %c0_3] : memref<16x32xbf16, #tpu.memory_space<vmem>>, vector<16x32xbf16>
    %c0_4 = arith.constant 0 : index
    %c0_5 = arith.constant 0 : index
    %c0_6 = arith.constant 0 : index
    %5 = vector.load %arg6[%c0_4, %c0_5, %c0_6] : memref<1x32x64xbf16, #tpu.memory_space<vmem>>, vector<1x32x64xbf16>
    %6 = vector.shape_cast %5 : vector<1x32x64xbf16> to vector<32x64xbf16>
    %cst = arith.constant dense<0.000000e+00> : vector<8x64xf32>
    %7 = tpu.matmul %3, %6, %cst {dimension_numbers = #tpu.dot_dimension_numbers<[1], [0], [0], [1], [0, 0, 1, 1], [], []>} : vector<8x32xbf16>, vector<32x64xbf16>, vector<8x64xf32> -> vector<8x64xf32>
    %c0_7 = arith.constant 0 : index
    %c0_8 = arith.constant 0 : index
    %c0_9 = arith.constant 0 : index
    %8 = vector.load %arg7[%c0_7, %c0_8, %c0_9] : memref<1x32x64xbf16, #tpu.memory_space<vmem>>, vector<1x32x64xbf16>
    %9 = vector.shape_cast %8 : vector<1x32x64xbf16> to vector<32x64xbf16>
    %cst_10 = arith.constant dense<0.000000e+00> : vector<16x64xf32>
    %10 = tpu.matmul %4, %9, %cst_10 {dimension_numbers = #tpu.dot_dimension_numbers<[1], [0], [0], [1], [0, 0, 1, 1], [], []>} : vector<16x32xbf16>, vector<32x64xbf16>, vector<16x64xf32> -> vector<16x64xf32>
    %11 = vector.extract_strided_slice %7 {offsets = [0, 0], sizes = [8, 32], strides = [1, 1]} : vector<8x64xf32> to vector<8x32xf32>
    %12 = arith.truncf %11 : vector<8x32xf32> to vector<8x32xbf16>
    %13 = vector.extract_strided_slice %7 {offsets = [0, 32], sizes = [8, 32], strides = [1, 1]} : vector<8x64xf32> to vector<8x32xf32>
    %c0_11 = arith.constant 0 : index
    %c0_12 = arith.constant 0 : index
    %c0_13 = arith.constant 0 : index
    %14 = vector.load %arg8[%c0_11, %c0_12, %c0_13] : memref<1x1x32xf32, #tpu.memory_space<vmem>>, vector<1x1x32xf32>
    %15 = vector.shape_cast %14 : vector<1x1x32xf32> to vector<1x32xf32>
    %16 = vector.broadcast %15 : vector<1x32xf32> to vector<8x32xf32>
    %17 = arith.addf %13, %16 : vector<8x32xf32>
    %18 = arith.negf %17 : vector<8x32xf32>
    %19 = math.exp %18 : vector<8x32xf32>
    %cst_14 = arith.constant 1.000000e+00 : f32
    %20 = vector.broadcast %cst_14 : f32 to vector<8x32xf32>
    %21 = arith.addf %20, %19 : vector<8x32xf32>
    %22 = arith.divf %20, %21 : vector<8x32xf32>
    %23 = vector.extract_strided_slice %10 {offsets = [0, 0], sizes = [16, 32], strides = [1, 1]} : vector<16x64xf32> to vector<16x32xf32>
    %24 = arith.truncf %23 : vector<16x32xf32> to vector<16x32xbf16>
    %25 = vector.extract_strided_slice %10 {offsets = [0, 32], sizes = [16, 32], strides = [1, 1]} : vector<16x64xf32> to vector<16x32xf32>
    %26 = arith.truncf %25 : vector<16x32xf32> to vector<16x32xbf16>
    %27 = vector.extract_strided_slice %12 {offsets = [0, 0], sizes = [8, 8], strides = [1, 1]} : vector<8x32xbf16> to vector<8x8xbf16>
    %28 = vector.extract_strided_slice %24 {offsets = [0, 0], sizes = [16, 8], strides = [1, 1]} : vector<16x32xbf16> to vector<16x8xbf16>
    %29 = vector.extract_strided_slice %26 {offsets = [0, 0], sizes = [16, 8], strides = [1, 1]} : vector<16x32xbf16> to vector<16x8xbf16>
    %cst_15 = arith.constant dense<0.000000e+00> : vector<8x16xf32>
    %30 = tpu.matmul %27, %28, %cst_15 {dimension_numbers = #tpu.dot_dimension_numbers<[1], [1], [0], [0], [0, 0, 1, 0], [], []>} : vector<8x8xbf16>, vector<16x8xbf16>, vector<8x16xf32> -> vector<8x16xf32>
    %cst_16 = arith.constant dense<0xFF800000> : vector<8xf32>
    %31 = vector.multi_reduction <maximumf>, %30, %cst_16 [1] : vector<8x16xf32> to vector<8xf32>
    %32 = vector.shape_cast %31 : vector<8xf32> to vector<8x1xf32>
    %cst_17 = arith.constant dense<0xFF800000> : vector<16xf32>
    %33 = vector.multi_reduction <maximumf>, %30, %cst_17 [0] : vector<8x16xf32> to vector<16xf32>
    %34 = vector.shape_cast %33 : vector<16xf32> to vector<1x16xf32>
    %35 = vector.broadcast %32 : vector<8x1xf32> to vector<8x16xf32>
    %36 = arith.subf %30, %35 : vector<8x16xf32>
    %37 = math.exp %36 : vector<8x16xf32>
    %38 = vector.broadcast %34 : vector<1x16xf32> to vector<8x16xf32>
    %39 = arith.subf %30, %38 : vector<8x16xf32>
    %40 = math.exp %39 : vector<8x16xf32>
    %cst_18 = arith.constant dense<0.000000e+00> : vector<8xf32>
    %41 = vector.multi_reduction <add>, %37, %cst_18 [1] : vector<8x16xf32> to vector<8xf32>
    %42 = vector.shape_cast %41 : vector<8xf32> to vector<8x1xf32>
    %43 = tpu.reciprocal %42 {approx = true} : vector<8x1xf32> -> vector<8x1xf32>
    %cst_19 = arith.constant dense<0.000000e+00> : vector<16xf32>
    %44 = vector.multi_reduction <add>, %40, %cst_19 [0] : vector<8x16xf32> to vector<16xf32>
    %45 = vector.shape_cast %44 : vector<16xf32> to vector<1x16xf32>
    %46 = tpu.reciprocal %45 {approx = true} : vector<1x16xf32> -> vector<1x16xf32>
    %47 = vector.broadcast %43 : vector<8x1xf32> to vector<8x16xf32>
    %48 = arith.mulf %37, %47 : vector<8x16xf32>
    %49 = vector.broadcast %46 : vector<1x16xf32> to vector<8x16xf32>
    %50 = arith.mulf %40, %49 : vector<8x16xf32>
    %51 = arith.mulf %48, %50 : vector<8x16xf32>
    %52 = arith.truncf %51 : vector<8x16xf32> to vector<8x16xbf16>
    %cst_20 = arith.constant dense<0.000000e+00> : vector<8x8xf32>
    %53 = tpu.matmul %52, %29, %cst_20 {dimension_numbers = #tpu.dot_dimension_numbers<[1], [0], [0], [1], [0, 0, 1, 1], [], []>} : vector<8x16xbf16>, vector<16x8xbf16>, vector<8x8xf32> -> vector<8x8xf32>
    %54 = vector.extract_strided_slice %12 {offsets = [0, 8], sizes = [8, 8], strides = [1, 1]} : vector<8x32xbf16> to vector<8x8xbf16>
    %55 = vector.extract_strided_slice %24 {offsets = [0, 8], sizes = [16, 8], strides = [1, 1]} : vector<16x32xbf16> to vector<16x8xbf16>
    %56 = vector.extract_strided_slice %26 {offsets = [0, 8], sizes = [16, 8], strides = [1, 1]} : vector<16x32xbf16> to vector<16x8xbf16>
    %cst_21 = arith.constant dense<0.000000e+00> : vector<8x16xf32>
    %57 = tpu.matmul %54, %55, %cst_21 {dimension_numbers = #tpu.dot_dimension_numbers<[1], [1], [0], [0], [0, 0, 1, 0], [], []>} : vector<8x8xbf16>, vector<16x8xbf16>, vector<8x16xf32> -> vector<8x16xf32>
    %cst_22 = arith.constant dense<0xFF800000> : vector<8xf32>
    %58 = vector.multi_reduction <maximumf>, %57, %cst_22 [1] : vector<8x16xf32> to vector<8xf32>
    %59 = vector.shape_cast %58 : vector<8xf32> to vector<8x1xf32>
    %cst_23 = arith.constant dense<0xFF800000> : vector<16xf32>
    %60 = vector.multi_reduction <maximumf>, %57, %cst_23 [0] : vector<8x16xf32> to vector<16xf32>
    %61 = vector.shape_cast %60 : vector<16xf32> to vector<1x16xf32>
    %62 = vector.broadcast %59 : vector<8x1xf32> to vector<8x16xf32>
    %63 = arith.subf %57, %62 : vector<8x16xf32>
    %64 = math.exp %63 : vector<8x16xf32>
    %65 = vector.broadcast %61 : vector<1x16xf32> to vector<8x16xf32>
    %66 = arith.subf %57, %65 : vector<8x16xf32>
    %67 = math.exp %66 : vector<8x16xf32>
    %cst_24 = arith.constant dense<0.000000e+00> : vector<8xf32>
    %68 = vector.multi_reduction <add>, %64, %cst_24 [1] : vector<8x16xf32> to vector<8xf32>
    %69 = vector.shape_cast %68 : vector<8xf32> to vector<8x1xf32>
    %70 = tpu.reciprocal %69 {approx = true} : vector<8x1xf32> -> vector<8x1xf32>
    %cst_25 = arith.constant dense<0.000000e+00> : vector<16xf32>
    %71 = vector.multi_reduction <add>, %67, %cst_25 [0] : vector<8x16xf32> to vector<16xf32>
    %72 = vector.shape_cast %71 : vector<16xf32> to vector<1x16xf32>
    %73 = tpu.reciprocal %72 {approx = true} : vector<1x16xf32> -> vector<1x16xf32>
    %74 = vector.broadcast %70 : vector<8x1xf32> to vector<8x16xf32>
    %75 = arith.mulf %64, %74 : vector<8x16xf32>
    %76 = vector.broadcast %73 : vector<1x16xf32> to vector<8x16xf32>
    %77 = arith.mulf %67, %76 : vector<8x16xf32>
    %78 = arith.mulf %75, %77 : vector<8x16xf32>
    %79 = arith.truncf %78 : vector<8x16xf32> to vector<8x16xbf16>
    %cst_26 = arith.constant dense<0.000000e+00> : vector<8x8xf32>
    %80 = tpu.matmul %79, %56, %cst_26 {dimension_numbers = #tpu.dot_dimension_numbers<[1], [0], [0], [1], [0, 0, 1, 1], [], []>} : vector<8x16xbf16>, vector<16x8xbf16>, vector<8x8xf32> -> vector<8x8xf32>
    %81 = vector.extract_strided_slice %12 {offsets = [0, 16], sizes = [8, 8], strides = [1, 1]} : vector<8x32xbf16> to vector<8x8xbf16>
    %82 = vector.extract_strided_slice %24 {offsets = [0, 16], sizes = [16, 8], strides = [1, 1]} : vector<16x32xbf16> to vector<16x8xbf16>
    %83 = vector.extract_strided_slice %26 {offsets = [0, 16], sizes = [16, 8], strides = [1, 1]} : vector<16x32xbf16> to vector<16x8xbf16>
    %cst_27 = arith.constant dense<0.000000e+00> : vector<8x16xf32>
    %84 = tpu.matmul %81, %82, %cst_27 {dimension_numbers = #tpu.dot_dimension_numbers<[1], [1], [0], [0], [0, 0, 1, 0], [], []>} : vector<8x8xbf16>, vector<16x8xbf16>, vector<8x16xf32> -> vector<8x16xf32>
    %cst_28 = arith.constant dense<0xFF800000> : vector<8xf32>
    %85 = vector.multi_reduction <maximumf>, %84, %cst_28 [1] : vector<8x16xf32> to vector<8xf32>
    %86 = vector.shape_cast %85 : vector<8xf32> to vector<8x1xf32>
    %cst_29 = arith.constant dense<0xFF800000> : vector<16xf32>
    %87 = vector.multi_reduction <maximumf>, %84, %cst_29 [0] : vector<8x16xf32> to vector<16xf32>
    %88 = vector.shape_cast %87 : vector<16xf32> to vector<1x16xf32>
    %89 = vector.broadcast %86 : vector<8x1xf32> to vector<8x16xf32>
    %90 = arith.subf %84, %89 : vector<8x16xf32>
    %91 = math.exp %90 : vector<8x16xf32>
    %92 = vector.broadcast %88 : vector<1x16xf32> to vector<8x16xf32>
    %93 = arith.subf %84, %92 : vector<8x16xf32>
    %94 = math.exp %93 : vector<8x16xf32>
    %cst_30 = arith.constant dense<0.000000e+00> : vector<8xf32>
    %95 = vector.multi_reduction <add>, %91, %cst_30 [1] : vector<8x16xf32> to vector<8xf32>
    %96 = vector.shape_cast %95 : vector<8xf32> to vector<8x1xf32>
    %97 = tpu.reciprocal %96 {approx = true} : vector<8x1xf32> -> vector<8x1xf32>
    %cst_31 = arith.constant dense<0.000000e+00> : vector<16xf32>
    %98 = vector.multi_reduction <add>, %94, %cst_31 [0] : vector<8x16xf32> to vector<16xf32>
    %99 = vector.shape_cast %98 : vector<16xf32> to vector<1x16xf32>
    %100 = tpu.reciprocal %99 {approx = true} : vector<1x16xf32> -> vector<1x16xf32>
    %101 = vector.broadcast %97 : vector<8x1xf32> to vector<8x16xf32>
    %102 = arith.mulf %91, %101 : vector<8x16xf32>
    %103 = vector.broadcast %100 : vector<1x16xf32> to vector<8x16xf32>
    %104 = arith.mulf %94, %103 : vector<8x16xf32>
    %105 = arith.mulf %102, %104 : vector<8x16xf32>
    %106 = arith.truncf %105 : vector<8x16xf32> to vector<8x16xbf16>
    %cst_32 = arith.constant dense<0.000000e+00> : vector<8x8xf32>
    %107 = tpu.matmul %106, %83, %cst_32 {dimension_numbers = #tpu.dot_dimension_numbers<[1], [0], [0], [1], [0, 0, 1, 1], [], []>} : vector<8x16xbf16>, vector<16x8xbf16>, vector<8x8xf32> -> vector<8x8xf32>
    %108 = vector.extract_strided_slice %12 {offsets = [0, 24], sizes = [8, 8], strides = [1, 1]} : vector<8x32xbf16> to vector<8x8xbf16>
    %109 = vector.extract_strided_slice %24 {offsets = [0, 24], sizes = [16, 8], strides = [1, 1]} : vector<16x32xbf16> to vector<16x8xbf16>
    %110 = vector.extract_strided_slice %26 {offsets = [0, 24], sizes = [16, 8], strides = [1, 1]} : vector<16x32xbf16> to vector<16x8xbf16>
    %cst_33 = arith.constant dense<0.000000e+00> : vector<8x16xf32>
    %111 = tpu.matmul %108, %109, %cst_33 {dimension_numbers = #tpu.dot_dimension_numbers<[1], [1], [0], [0], [0, 0, 1, 0], [], []>} : vector<8x8xbf16>, vector<16x8xbf16>, vector<8x16xf32> -> vector<8x16xf32>
    %cst_34 = arith.constant dense<0xFF800000> : vector<8xf32>
    %112 = vector.multi_reduction <maximumf>, %111, %cst_34 [1] : vector<8x16xf32> to vector<8xf32>
    %113 = vector.shape_cast %112 : vector<8xf32> to vector<8x1xf32>
    %cst_35 = arith.constant dense<0xFF800000> : vector<16xf32>
    %114 = vector.multi_reduction <maximumf>, %111, %cst_35 [0] : vector<8x16xf32> to vector<16xf32>
    %115 = vector.shape_cast %114 : vector<16xf32> to vector<1x16xf32>
    %116 = vector.broadcast %113 : vector<8x1xf32> to vector<8x16xf32>
    %117 = arith.subf %111, %116 : vector<8x16xf32>
    %118 = math.exp %117 : vector<8x16xf32>
    %119 = vector.broadcast %115 : vector<1x16xf32> to vector<8x16xf32>
    %120 = arith.subf %111, %119 : vector<8x16xf32>
    %121 = math.exp %120 : vector<8x16xf32>
    %cst_36 = arith.constant dense<0.000000e+00> : vector<8xf32>
    %122 = vector.multi_reduction <add>, %118, %cst_36 [1] : vector<8x16xf32> to vector<8xf32>
    %123 = vector.shape_cast %122 : vector<8xf32> to vector<8x1xf32>
    %124 = tpu.reciprocal %123 {approx = true} : vector<8x1xf32> -> vector<8x1xf32>
    %cst_37 = arith.constant dense<0.000000e+00> : vector<16xf32>
    %125 = vector.multi_reduction <add>, %121, %cst_37 [0] : vector<8x16xf32> to vector<16xf32>
    %126 = vector.shape_cast %125 : vector<16xf32> to vector<1x16xf32>
    %127 = tpu.reciprocal %126 {approx = true} : vector<1x16xf32> -> vector<1x16xf32>
    %128 = vector.broadcast %124 : vector<8x1xf32> to vector<8x16xf32>
    %129 = arith.mulf %118, %128 : vector<8x16xf32>
    %130 = vector.broadcast %127 : vector<1x16xf32> to vector<8x16xf32>
    %131 = arith.mulf %121, %130 : vector<8x16xf32>
    %132 = arith.mulf %129, %131 : vector<8x16xf32>
    %133 = arith.truncf %132 : vector<8x16xf32> to vector<8x16xbf16>
    %cst_38 = arith.constant dense<0.000000e+00> : vector<8x8xf32>
    %134 = tpu.matmul %133, %110, %cst_38 {dimension_numbers = #tpu.dot_dimension_numbers<[1], [0], [0], [1], [0, 0, 1, 1], [], []>} : vector<8x16xbf16>, vector<16x8xbf16>, vector<8x8xf32> -> vector<8x8xf32>
    %135 = tpu.concatenate %53, %80, %107, %134 in 1 : vector<8x8xf32>, vector<8x8xf32>, vector<8x8xf32>, vector<8x8xf32> -> vector<8x32xf32>
    %136 = arith.mulf %135, %22 : vector<8x32xf32>
    %137 = arith.truncf %136 : vector<8x32xf32> to vector<8x32xbf16>
    %c0_39 = arith.constant 0 : index
    %c0_40 = arith.constant 0 : index
    %c0_41 = arith.constant 0 : index
    %138 = vector.load %arg9[%c0_39, %c0_40, %c0_41] : memref<1x32x32xbf16, #tpu.memory_space<vmem>>, vector<1x32x32xbf16>
    %139 = vector.shape_cast %138 : vector<1x32x32xbf16> to vector<32x32xbf16>
    %cst_42 = arith.constant dense<0.000000e+00> : vector<8x32xf32>
    %140 = tpu.matmul %137, %139, %cst_42 {dimension_numbers = #tpu.dot_dimension_numbers<[1], [0], [0], [1], [0, 0, 1, 1], [], []>} : vector<8x32xbf16>, vector<32x32xbf16>, vector<8x32xf32> -> vector<8x32xf32>
    %c0_i32_43 = arith.constant 0 : i32
    %141 = arith.cmpi eq, %arg1, %c0_i32_43 : i32
    %142 = arith.extui %141 : i1 to i32
    %c0_i32_44 = arith.constant 0 : i32
    %143 = arith.cmpi ne, %142, %c0_i32_44 : i32
    scf.if %143 {
      %c0_47 = arith.constant 0 : index
      %c0_48 = arith.constant 0 : index
      %147 = vector.load %arg10[%c0_47, %c0_48] : memref<1x32xf32, #tpu.memory_space<vmem>>, vector<1x32xf32>
      %148 = vector.broadcast %147 : vector<1x32xf32> to vector<8x32xf32>
      %149 = arith.addf %140, %148 : vector<8x32xf32>
      %c0_49 = arith.constant 0 : index
      %c0_50 = arith.constant 0 : index
      %c0_51 = arith.constant 0 : index
      %150 = vector.load %arg11[%c0_49, %c0_50, %c0_51] : memref<1x8x32xf32, #tpu.memory_space<vmem>>, vector<1x8x32xf32>
      %151 = vector.shape_cast %150 : vector<1x8x32xf32> to vector<8x32xf32>
      %152 = vector.shape_cast %149 : vector<8x32xf32> to vector<1x8x32xf32>
      tpu.vector_store %arg11[%c0_49, %c0_50, %c0_51], %152 {strides = array<i32>} : memref<1x8x32xf32, #tpu.memory_space<vmem>>, vector<1x8x32xf32>,
    } else {
    }
    %c0_i32_45 = arith.constant 0 : i32
    %144 = arith.cmpi sgt, %arg1, %c0_i32_45 : i32
    %145 = arith.extui %144 : i1 to i32
    %c0_i32_46 = arith.constant 0 : i32
    %146 = arith.cmpi ne, %145, %c0_i32_46 : i32
    scf.if %146 {
      %c0_47 = arith.constant 0 : index
      %c0_48 = arith.constant 0 : index
      %c0_49 = arith.constant 0 : index
      %147 = vector.load %arg11[%c0_47, %c0_48, %c0_49] : memref<1x8x32xf32, #tpu.memory_space<vmem>>, vector<1x8x32xf32>
      %148 = vector.shape_cast %147 : vector<1x8x32xf32> to vector<8x32xf32>
      %149 = arith.addf %148, %140 : vector<8x32xf32>
      %c0_50 = arith.constant 0 : index
      %c0_51 = arith.constant 0 : index
      %c0_52 = arith.constant 0 : index
      %150 = vector.load %arg11[%c0_50, %c0_51, %c0_52] : memref<1x8x32xf32, #tpu.memory_space<vmem>>, vector<1x8x32xf32>
      %151 = vector.shape_cast %150 : vector<1x8x32xf32> to vector<8x32xf32>
      %152 = vector.shape_cast %149 : vector<8x32xf32> to vector<1x8x32xf32>
      tpu.vector_store %arg11[%c0_50, %c0_51, %c0_52], %152 {strides = array<i32>} : memref<1x8x32xf32, #tpu.memory_space<vmem>>, vector<1x8x32xf32>,
    } else {
    }
    return
  }
  func.func @transform_0(%arg0: i32, %arg1: i32) -> (i32, i32, i32) {
    %c0_i32 = arith.constant 0 : i32
    %c0_i32_0 = arith.constant 0 : i32
    %c0_i32_1 = arith.constant 0 : i32
    return %arg0, %c0_i32, %c0_i32_0 : i32, i32, i32
  }
  func.func @transform_1(%arg0: i32, %arg1: i32) -> (i32, i32, i32) {
    %c0_i32 = arith.constant 0 : i32
    %c0_i32_0 = arith.constant 0 : i32
    %c0_i32_1 = arith.constant 0 : i32
    return %arg0, %c0_i32, %c0_i32_0 : i32, i32, i32
  }
  func.func @transform_2(%arg0: i32, %arg1: i32) -> (i32, i32) {
    %c0_i32 = arith.constant 0 : i32
    %c0_i32_0 = arith.constant 0 : i32
    %c0_i32_1 = arith.constant 0 : i32
    return %c0_i32, %c0_i32_0 : i32, i32
  }
  func.func @transform_3(%arg0: i32, %arg1: i32) -> (i32, i32) {
    %c0_i32 = arith.constant 0 : i32
    %c0_i32_0 = arith.constant 0 : i32
    %c0_i32_1 = arith.constant 0 : i32
    return %c0_i32, %c0_i32_0 : i32, i32
  }
  func.func @transform_4(%arg0: i32, %arg1: i32) -> (i32, i32, i32) {
    %c0_i32 = arith.constant 0 : i32
    %c0_i32_0 = arith.constant 0 : i32
    %c0_i32_1 = arith.constant 0 : i32
    return %arg1, %c0_i32, %c0_i32_0 : i32, i32, i32
  }
  func.func @transform_5(%arg0: i32, %arg1: i32) -> (i32, i32, i32) {
    %c0_i32 = arith.constant 0 : i32
    %c0_i32_0 = arith.constant 0 : i32
    %c0_i32_1 = arith.constant 0 : i32
    return %arg1, %c0_i32, %c0_i32_0 : i32, i32, i32
  }
  func.func @transform_6(%arg0: i32, %arg1: i32) -> (i32, i32, i32) {
    %c0_i32 = arith.constant 0 : i32
    %c0_i32_0 = arith.constant 0 : i32
    %c0_i32_1 = arith.constant 0 : i32
    return %arg1, %c0_i32, %c0_i32_0 : i32, i32, i32
  }
  func.func @transform_7(%arg0: i32, %arg1: i32) -> (i32, i32, i32) {
    %c0_i32 = arith.constant 0 : i32
    %c0_i32_0 = arith.constant 0 : i32
    %c0_i32_1 = arith.constant 0 : i32
    return %arg1, %c0_i32, %c0_i32_0 : i32, i32, i32
  }
  func.func @transform_8(%arg0: i32, %arg1: i32) -> (i32, i32) {
    %c0_i32 = arith.constant 0 : i32
    %c0_i32_0 = arith.constant 0 : i32
    %c0_i32_1 = arith.constant 0 : i32
    return %c0_i32, %c0_i32_0 : i32, i32
  }
  func.func @transform_9(%arg0: i32, %arg1: i32) -> (i32, i32, i32) {
    %c0_i32 = arith.constant 0 : i32
    %c0_i32_0 = arith.constant 0 : i32
    %c0_i32_1 = arith.constant 0 : i32
    return %arg0, %c0_i32, %c0_i32_0 : i32, i32, i32
  }
}

</mosaic_0001>

<llo_original>
// kernel: tpu_custom_call.1
$region0: #{tpu_custom_call.1}
  #allocation0 [shape = 'u32[]', space=smem, size = 0x4, offset = 0x4, fixed_abs, tag = 'smem constant byte address 0x4 - core index']
  #allocation1 [shape = 'u32[144,128]{1,0:T(1,128)}', space=vmem, size = 0x12000, scoped, tag = 'internal scratch']
  #allocation2 [shape = 'bf16[8,32]{1,0:T(8,128)(2,1)}', space=vmem, size = 0x800, scoped, tag = 'scratch operand']
  #allocation3 [shape = 'bf16[16,32]{1,0:T(16,128)(2,1)}', space=vmem, size = 0x1000, scoped, tag = 'scratch operand']
  %s0 = inlined_call_operand.hbm [shape: f32[2,8,32], index: 0, kind: input, shape index: {}]
  %s1 = inlined_call_operand.hbm [shape: f32[2,16,32], index: 1, kind: input, shape index: {}]
  %s2 = inlined_call_operand.vmem [shape: f32[1,32], index: 2, kind: input, shape index: {}]
  %s3 = inlined_call_operand.vmem [shape: f32[1,32], index: 3, kind: input, shape index: {}]
  %s4 = inlined_call_operand.hbm [shape: bf16[1,32,64], index: 4, kind: input, shape index: {}]
  %s5 = inlined_call_operand.vmem [shape: bf16[1,32,64], index: 5, kind: input, shape index: {}]
  %s6 = inlined_call_operand.vmem [shape: f32[1,1,32], index: 6, kind: input, shape index: {}]
  %s7 = inlined_call_operand.hbm [shape: bf16[1,32,32], index: 7, kind: input, shape index: {}]
  %s8 = inlined_call_operand.vmem [shape: f32[1,32], index: 8, kind: input, shape index: {}]
  %s9 = inlined_call_operand.hbm [shape: f32[2,8,32], index: 9, kind: output, shape index: {}]
  %s10 = sld [smem:[#allocation0]]
  $region97: #{tpu_custom_call.1} parent=0
    _
  %s12 = ssub.s32 1, %s10
  %s13 = scalar_select 0, %s12, %s10
  $region1: #{tpu_custom_call.1} parent=0
    #allocation4 [shape = 'u8[8192]{0}', space=vmem, size = 0x2000, scoped, tag = 'input window, operand 0']
    #allocation5 [shape = 's32[2]{0}', space=sflag, size = 0x8, scoped, tag = 'scoped memory for tpu_custom_call.1']
    #allocation6 [shape = 's32[2]{0}', space=sflag, size = 0x8, scoped, tag = 'scoped memory for tpu_custom_call.1']
    #allocation7 [shape = 'u8[16384]{0}', space=vmem, size = 0x4000, scoped, tag = 'input window, operand 1']
    #allocation8 [shape = 's32[2]{0}', space=sflag, size = 0x8, scoped, tag = 'scoped memory for tpu_custom_call.1']
    #allocation9 [shape = 'u8[8192]{0}', space=vmem, size = 0x2000, scoped, tag = 'input window, operand 4, single buffered']
    #allocation10 [shape = 'u8[8192]{0}', space=vmem, size = 0x2000, scoped, tag = 'input window, operand 7, single buffered']
    #allocation11 [shape = 's32[1]{0}', space=sflag, size = 0x4, scoped, tag = 'scoped memory for tpu_custom_call.1']
    #allocation12 [shape = 'u8[8192]{0}', space=vmem, size = 0x2000, scoped, tag = 'output window, operand 0']
    %14 = vsyncpa [#allocation5], 0
    %s15 = scalar_lea.sflag [#allocation5], 1
    %16 = vsyncpa %s15, 0
    %17 = vsyncpa [#allocation8], 0
    %s18 = scalar_lea.sflag [#allocation8], 1
    %19 = vsyncpa %s18, 0
    %20 = vsyncpa [#allocation11], 0
    %21 = vsyncpa [#allocation6], 0
    %s22 = scalar_lea.sflag [#allocation6], 1
    %23 = vsyncpa %s22, 0
    loop: start=0, step=1, limit=4
    $region2: #{tpu_custom_call.1} parent=1 // loop_pre_header
      _
    $region3: #{tpu_custom_call.1} parent=1 // loop_header
      %s25 = sphi 0, %s29
      %p26 = scmp.ge.s32.totalorder %s25, 4
      %s32 = sphi 0, %s44
      %s33 = sphi 0, %s40
      %s34 = sphi 0, %s32
      %s35 = sphi 0, %s33
      %s36 = sphi 0, %s34
      %s37 = sphi 0, %s35
      %s47 = sphi 0, %s49
      %s50 = sphi 0, %s47
      %s51 = sphi 0, %s50
      %s67 = sphi 0, %s51
      %s73 = sphi 0, %s75
      %s76 = sphi 0, %s73
      %s77 = sphi 0, %s76
      %s93 = sphi 0, %s77
      %s97 = sphi 0, %s97
      %s99 = sphi 0, %s97
      %s100 = sphi 0, %s99
      %s114 = sphi 0, %s100
      %s118 = sphi 0, %s118
      %s120 = sphi 0, %s118
      %s121 = sphi 0, %s120
      %s135 = sphi 0, %s121
      %s141 = sphi 0, %s143
      %s144 = sphi 0, %s141
      %s145 = sphi 0, %s144
      %s161 = sphi 0, %s145
      %s167 = sphi 0, %s169
      %s170 = sphi 0, %s167
      %s171 = sphi 0, %s170
      %s187 = sphi 0, %s171
      %s193 = sphi 0, %s195
      %s196 = sphi 0, %s193
      %s197 = sphi 0, %s196
      %s213 = sphi 0, %s197
      %s219 = sphi 0, %s221
      %s222 = sphi 0, %s219
      %s223 = sphi 0, %s222
      %s239 = sphi 0, %s223
      %s243 = sphi 0, %s243
      %s245 = sphi 0, %s243
      %s246 = sphi 0, %s245
      %s260 = sphi 0, %s246
      %s266 = sphi 0, %s268
      %s269 = sphi 0, %s266
      %s270 = sphi 0, %s269
      %s286 = sphi 0, %s270
    $region4: #{tpu_custom_call.1} parent=1 // loop_header_branch
      %28 = sbr.rel (%p26) target = $region8
    $region5: #{tpu_custom_call.1} parent=1 // loop_body
      %s30 = ssub.s32 %s25, 1
      %s31 = ssub.s32 %s25, 2
      %s38 = sadd.s32 1, %s33
      %p39 = scmp.ge.s32.totalorder %s38, 1
      %s40 = scalar_select %p39, 0, %s38
      %s41 = sadd.s32 1, %s32
      %s42 = scalar_select %p39, %s41, %s32
      %p43 = scmp.ge.s32.totalorder %s42, 2
      %s44 = scalar_select %p43, 0, %s42
      %s45 = ssub.s32 %s32, %s44
      %p46 = scmp.eq.s32.totalorder %s45, 0
      %s48 = sadd.s32 %s47, 1
      %s49 = scalar_select %p46, %s47, %s48
      %p52 = pneg %p46
      %p53 = scmp.eq.s32.totalorder %s25, 1
      %p54 = por %p52, %p53
      %p55 = scmp.ne.s32.totalorder %s47, %s50
      %p56 = scmp.eq.s32.totalorder %s25, 0
      %p57 = por %p55, %p56
      %p58 = scmp.ne.s32.totalorder %s47, %s50
      %p59 = scmp.eq.s32.totalorder %s30, 1
      %p60 = por %p58, %p59
      %p61 = scmp.ne.s32.totalorder %s50, %s51
      %p62 = scmp.eq.s32.totalorder %s30, 0
      %p63 = por %p61, %p62
      %p64 = scmp.ne.s32.totalorder %s50, %s51
      %p65 = scmp.eq.s32.totalorder %s31, 1
      %p66 = por %p64, %p65
      %p68 = scmp.ne.s32.totalorder %s51, %s67
      %p69 = scmp.eq.s32.totalorder %s31, 0
      %p70 = por %p68, %p69
      %s71 = ssub.s32 %s32, %s44
      %p72 = scmp.eq.s32.totalorder %s71, 0
      %s74 = sadd.s32 %s73, 1
      %s75 = scalar_select %p72, %s73, %s74
      %p78 = pneg %p72
      %p79 = scmp.eq.s32.totalorder %s25, 1
      %p80 = por %p78, %p79
      %p81 = scmp.ne.s32.totalorder %s73, %s76
      %p82 = scmp.eq.s32.totalorder %s25, 0
      %p83 = por %p81, %p82
      %p84 = scmp.ne.s32.totalorder %s73, %s76
      %p85 = scmp.eq.s32.totalorder %s30, 1
      %p86 = por %p84, %p85
      %p87 = scmp.ne.s32.totalorder %s76, %s77
      %p88 = scmp.eq.s32.totalorder %s30, 0
      %p89 = por %p87, %p88
      %p90 = scmp.ne.s32.totalorder %s76, %s77
      %p91 = scmp.eq.s32.totalorder %s31, 1
      %p92 = por %p90, %p91
      %p94 = scmp.ne.s32.totalorder %s77, %s93
      %p95 = scmp.eq.s32.totalorder %s31, 0
      %p96 = por %p94, %p95
      %s98 = sadd.s32 %s97, 1
      %p101 = scmp.eq.s32.totalorder %s25, 1
      %p102 = scmp.ne.s32.totalorder %s97, %s99
      %p103 = scmp.eq.s32.totalorder %s25, 0
      %p104 = por %p102, %p103
      %p105 = scmp.ne.s32.totalorder %s97, %s99
      %p106 = scmp.eq.s32.totalorder %s30, 1
      %p107 = por %p105, %p106
      %p108 = scmp.ne.s32.totalorder %s99, %s100
      %p109 = scmp.eq.s32.totalorder %s30, 0
      %p110 = por %p108, %p109
      %p111 = scmp.ne.s32.totalorder %s99, %s100
      %p112 = scmp.eq.s32.totalorder %s31, 1
      %p113 = por %p111, %p112
      %p115 = scmp.ne.s32.totalorder %s100, %s114
      %p116 = scmp.eq.s32.totalorder %s31, 0
      %p117 = por %p115, %p116
      %s119 = sadd.s32 %s118, 1
      %p122 = scmp.eq.s32.totalorder %s25, 1
      %p123 = scmp.ne.s32.totalorder %s118, %s120
      %p124 = scmp.eq.s32.totalorder %s25, 0
      %p125 = por %p123, %p124
      %p126 = scmp.ne.s32.totalorder %s118, %s120
      %p127 = scmp.eq.s32.totalorder %s30, 1
      %p128 = por %p126, %p127
      %p129 = scmp.ne.s32.totalorder %s120, %s121
      %p130 = scmp.eq.s32.totalorder %s30, 0
      %p131 = por %p129, %p130
      %p132 = scmp.ne.s32.totalorder %s120, %s121
      %p133 = scmp.eq.s32.totalorder %s31, 1
      %p134 = por %p132, %p133
      %p136 = scmp.ne.s32.totalorder %s121, %s135
      %p137 = scmp.eq.s32.totalorder %s31, 0
      %p138 = por %p136, %p137
      %s139 = ssub.s32 %s33, %s40
      %p140 = scmp.eq.s32.totalorder %s139, 0
      %s142 = sadd.s32 %s141, 1
      %s143 = scalar_select %p140, %s141, %s142
      %p146 = pneg %p140
      %p147 = scmp.eq.s32.totalorder %s25, 1
      %p148 = por %p146, %p147
      %p149 = scmp.ne.s32.totalorder %s141, %s144
      %p150 = scmp.eq.s32.totalorder %s25, 0
      %p151 = por %p149, %p150
      %p152 = scmp.ne.s32.totalorder %s141, %s144
      %p153 = scmp.eq.s32.totalorder %s30, 1
      %p154 = por %p152, %p153
      %p155 = scmp.ne.s32.totalorder %s144, %s145
      %p156 = scmp.eq.s32.totalorder %s30, 0
      %p157 = por %p155, %p156
      %p158 = scmp.ne.s32.totalorder %s144, %s145
      %p159 = scmp.eq.s32.totalorder %s31, 1
      %p160 = por %p158, %p159
      %p162 = scmp.ne.s32.totalorder %s145, %s161
      %p163 = scmp.eq.s32.totalorder %s31, 0
      %p164 = por %p162, %p163
      %s165 = ssub.s32 %s33, %s40
      %p166 = scmp.eq.s32.totalorder %s165, 0
      %s168 = sadd.s32 %s167, 1
      %s169 = scalar_select %p166, %s167, %s168
      %p172 = pneg %p166
      %p173 = scmp.eq.s32.totalorder %s25, 1
      %p174 = por %p172, %p173
      %p175 = scmp.ne.s32.totalorder %s167, %s170
      %p176 = scmp.eq.s32.totalorder %s25, 0
      %p177 = por %p175, %p176
      %p178 = scmp.ne.s32.totalorder %s167, %s170
      %p179 = scmp.eq.s32.totalorder %s30, 1
      %p180 = por %p178, %p179
      %p181 = scmp.ne.s32.totalorder %s170, %s171
      %p182 = scmp.eq.s32.totalorder %s30, 0
      %p183 = por %p181, %p182
      %p184 = scmp.ne.s32.totalorder %s170, %s171
      %p185 = scmp.eq.s32.totalorder %s31, 1
      %p186 = por %p184, %p185
      %p188 = scmp.ne.s32.totalorder %s171, %s187
      %p189 = scmp.eq.s32.totalorder %s31, 0
      %p190 = por %p188, %p189
      %s191 = ssub.s32 %s33, %s40
      %p192 = scmp.eq.s32.totalorder %s191, 0
      %s194 = sadd.s32 %s193, 1
      %s195 = scalar_select %p192, %s193, %s194
      %p198 = pneg %p192
      %p199 = scmp.eq.s32.totalorder %s25, 1
      %p200 = por %p198, %p199
      %p201 = scmp.ne.s32.totalorder %s193, %s196
      %p202 = scmp.eq.s32.totalorder %s25, 0
      %p203 = por %p201, %p202
      %p204 = scmp.ne.s32.totalorder %s193, %s196
      %p205 = scmp.eq.s32.totalorder %s30, 1
      %p206 = por %p204, %p205
      %p207 = scmp.ne.s32.totalorder %s196, %s197
      %p208 = scmp.eq.s32.totalorder %s30, 0
      %p209 = por %p207, %p208
      %p210 = scmp.ne.s32.totalorder %s196, %s197
      %p211 = scmp.eq.s32.totalorder %s31, 1
      %p212 = por %p210, %p211
      %p214 = scmp.ne.s32.totalorder %s197, %s213
      %p215 = scmp.eq.s32.totalorder %s31, 0
      %p216 = por %p214, %p215
      %s217 = ssub.s32 %s33, %s40
      %p218 = scmp.eq.s32.totalorder %s217, 0
      %s220 = sadd.s32 %s219, 1
      %s221 = scalar_select %p218, %s219, %s220
      %p224 = pneg %p218
      %p225 = scmp.eq.s32.totalorder %s25, 1
      %p226 = por %p224, %p225
      %p227 = scmp.ne.s32.totalorder %s219, %s222
      %p228 = scmp.eq.s32.totalorder %s25, 0
      %p229 = por %p227, %p228
      %p230 = scmp.ne.s32.totalorder %s219, %s222
      %p231 = scmp.eq.s32.totalorder %s30, 1
      %p232 = por %p230, %p231
      %p233 = scmp.ne.s32.totalorder %s222, %s223
      %p234 = scmp.eq.s32.totalorder %s30, 0
      %p235 = por %p233, %p234
      %p236 = scmp.ne.s32.totalorder %s222, %s223
      %p237 = scmp.eq.s32.totalorder %s31, 1
      %p238 = por %p236, %p237
      %p240 = scmp.ne.s32.totalorder %s223, %s239
      %p241 = scmp.eq.s32.totalorder %s31, 0
      %p242 = por %p240, %p241
      %s244 = sadd.s32 %s243, 1
      %p247 = scmp.eq.s32.totalorder %s25, 1
      %p248 = scmp.ne.s32.totalorder %s243, %s245
      %p249 = scmp.eq.s32.totalorder %s25, 0
      %p250 = por %p248, %p249
      %p251 = scmp.ne.s32.totalorder %s243, %s245
      %p252 = scmp.eq.s32.totalorder %s30, 1
      %p253 = por %p251, %p252
      %p254 = scmp.ne.s32.totalorder %s245, %s246
      %p255 = scmp.eq.s32.totalorder %s30, 0
      %p256 = por %p254, %p255
      %p257 = scmp.ne.s32.totalorder %s245, %s246
      %p258 = scmp.eq.s32.totalorder %s31, 1
      %p259 = por %p257, %p258
      %p261 = scmp.ne.s32.totalorder %s246, %s260
      %p262 = scmp.eq.s32.totalorder %s31, 0
      %p263 = por %p261, %p262
      %s264 = ssub.s32 %s32, %s44
      %p265 = scmp.eq.s32.totalorder %s264, 0
      %s267 = sadd.s32 %s266, 1
      %s268 = scalar_select %p265, %s266, %s267
      %p271 = pneg %p265
      %p272 = scmp.eq.s32.totalorder %s25, 1
      %p273 = por %p271, %p272
      %p274 = scmp.ne.s32.totalorder %s266, %s269
      %p275 = scmp.eq.s32.totalorder %s25, 0
      %p276 = por %p274, %p275
      %p277 = scmp.ne.s32.totalorder %s266, %s269
      %p278 = scmp.eq.s32.totalorder %s30, 1
      %p279 = por %p277, %p278
      %p280 = scmp.ne.s32.totalorder %s269, %s270
      %p281 = scmp.eq.s32.totalorder %s30, 0
      %p282 = por %p280, %p281
      %p283 = scmp.ne.s32.totalorder %s269, %s270
      %p284 = scmp.eq.s32.totalorder %s31, 1
      %p285 = por %p283, %p284
      %p287 = scmp.ne.s32.totalorder %s270, %s286
      %p288 = scmp.eq.s32.totalorder %s31, 0
      %p289 = por %p287, %p288
      %p290 = scmp.le.s32.totalorder 1, %s25
      %p291 = scmp.lt.s32.totalorder %s25, 3
      %p292 = pnand %p290, %p291
      %p293 = pneg %p292
      // Predicated region
      $region9: #{tpu_custom_call.1} parent=5 // pred_check
        _
      $region10: #{tpu_custom_call.1} parent=5 // pred_check_branch
        %295 = sbr.rel (%p292) target = $region12
      $region11: #{tpu_custom_call.1} parent=5 // pred_region
        %s296 = ssub.s32 %s25, 1
        // Predicated region
        $region13: #{tpu_custom_call.1} parent=11 // pred_check
          %p297 = pneg %p110
        $region14: #{tpu_custom_call.1} parent=11 // pred_check_branch
          %299 = sbr.rel (%p297) target = $region16
        $region15: #{tpu_custom_call.1} parent=11 // pred_region
          _
        $region16: #{tpu_custom_call.1} parent=11 // pred_fallthru
          _
        // Predicated region
        $region17: #{tpu_custom_call.1} parent=11 // pred_check
          %p300 = pneg %p131
        $region18: #{tpu_custom_call.1} parent=11 // pred_check_branch
          %302 = sbr.rel (%p300) target = $region20
        $region19: #{tpu_custom_call.1} parent=11 // pred_region
          _
        $region20: #{tpu_custom_call.1} parent=11 // pred_fallthru
          _
        // Predicated region
        $region21: #{tpu_custom_call.1} parent=11 // pred_check
          %p303 = pneg %p157
        $region22: #{tpu_custom_call.1} parent=11 // pred_check_branch
          %305 = sbr.rel (%p303) target = $region24
        $region23: #{tpu_custom_call.1} parent=11 // pred_region
          %s307 = ssub.s32 256, 256
          %308 = vsyncadd [#allocation8], %s307
          %s309 = smul.addr %s35, 4
          %s310 = smul.addr %s309, 64
          %s311 = scalar_lea.hbm %s4, %s310
          %s312 = sshll.u32 [#allocation9], 4
          %s313 = int_to_ptr.vmem [resolvable:$true] %s312
          %318 = dma.hbm_to_vmem [thread:$0]  %s311, 256, %s313, [#allocation8], 64, 64, 4
        $region24: #{tpu_custom_call.1} parent=11 // pred_fallthru
          _
        // Predicated region
        $region25: #{tpu_custom_call.1} parent=11 // pred_check
          %p319 = pneg %p183
        $region26: #{tpu_custom_call.1} parent=11 // pred_check_branch
          %321 = sbr.rel (%p319) target = $region28
        $region27: #{tpu_custom_call.1} parent=11 // pred_region
          %p322 = scmp.lt.s32.totalorder %s35, 0
          %s323 = scalar_select %p322, %s35, 0
          %s324 = smul.addr %s323, 4
          %s325 = smul.addr %s324, 4
          %s326 = scalar_lea.vmem %s5, %s325
        $region28: #{tpu_custom_call.1} parent=11 // pred_fallthru
          _
        // Predicated region
        $region29: #{tpu_custom_call.1} parent=11 // pred_check
          %p327 = pneg %p209
        $region30: #{tpu_custom_call.1} parent=11 // pred_check_branch
          %329 = sbr.rel (%p327) target = $region32
        $region31: #{tpu_custom_call.1} parent=11 // pred_region
          %p330 = scmp.lt.s32.totalorder %s35, 0
          %s331 = scalar_select %p330, %s35, 0
          %s332 = scalar_lea.vmem %s6, %s331
        $region32: #{tpu_custom_call.1} parent=11 // pred_fallthru
          _
        // Predicated region
        $region33: #{tpu_custom_call.1} parent=11 // pred_check
          %p333 = pneg %p235
        $region34: #{tpu_custom_call.1} parent=11 // pred_check_branch
          %335 = sbr.rel (%p333) target = $region36
        $region35: #{tpu_custom_call.1} parent=11 // pred_region
          %s337 = ssub.s32 256, 256
          %338 = vsyncadd [#allocation11], %s337
          %s339 = smul.addr %s35, 4
          %s340 = smul.addr %s339, 64
          %s341 = scalar_lea.hbm %s7, %s340
          %s342 = sshll.u32 [#allocation10], 4
          %s343 = int_to_ptr.vmem [resolvable:$true] %s342
          %348 = dma.hbm_to_vmem [thread:$0]  %s341, 256, %s343, [#allocation11], 64, 64, 4
        $region36: #{tpu_custom_call.1} parent=11 // pred_fallthru
          _
        // Predicated region
        $region37: #{tpu_custom_call.1} parent=11 // pred_check
          %p349 = pneg %p256
        $region38: #{tpu_custom_call.1} parent=11 // pred_check_branch
          %351 = sbr.rel (%p349) target = $region40
        $region39: #{tpu_custom_call.1} parent=11 // pred_region
          _
        $region40: #{tpu_custom_call.1} parent=11 // pred_fallthru
          _
      $region12: #{tpu_custom_call.1} parent=5 // pred_fallthru
        _
      %p352 = scmp.lt.s32.totalorder %s25, 2
      // Predicated region
      $region41: #{tpu_custom_call.1} parent=5 // pred_check
        %p353 = pneg %p352
      $region42: #{tpu_custom_call.1} parent=5 // pred_check_branch
        %355 = sbr.rel (%p353) target = $region44
      $region43: #{tpu_custom_call.1} parent=5 // pred_region
        // Predicated region
        $region45: #{tpu_custom_call.1} parent=43 // pred_check
          %p356 = pneg %p57
        $region46: #{tpu_custom_call.1} parent=43 // pred_check_branch
          %358 = sbr.rel (%p356) target = $region48
        $region47: #{tpu_custom_call.1} parent=43 // pred_region
          %s359 = sand.u32 %s47, 1
          %s360 = scalar_lea.sflag [#allocation5], %s359
          %s361 = sand.u32 %s47, 1
          %s362 = smul.addr %s361, 8
          %s363 = scalar_lea.vmem [#allocation4], %s362
          %s365 = ssub.s32 128, 128
          %366 = vsyncadd %s360, %s365
          %s367 = smul.addr %s32, 128
          %s368 = scalar_lea.hbm %s0, %s367
          %s370 = sshll.u32 %s363, 4
          %s371 = int_to_ptr.vmem [resolvable:$true] %s370
          %373 = dma.hbm_to_vmem [thread:$0]  %s368, 128, %s371, %s360
        $region48: #{tpu_custom_call.1} parent=43 // pred_fallthru
          _
        // Predicated region
        $region49: #{tpu_custom_call.1} parent=43 // pred_check
          %p374 = pneg %p83
        $region50: #{tpu_custom_call.1} parent=43 // pred_check_branch
          %376 = sbr.rel (%p374) target = $region52
        $region51: #{tpu_custom_call.1} parent=43 // pred_region
          %s377 = sand.u32 %s25, 1
          %s378 = scalar_lea.sflag [#allocation8], %s377
          %s379 = sand.u32 %s73, 1
          %s380 = smul.addr %s379, 16
          %s381 = scalar_lea.vmem [#allocation7], %s380
          %s383 = ssub.s32 256, 256
          %384 = vsyncadd %s378, %s383
          %s385 = smul.addr %s32, 2
          %s386 = smul.addr %s385, 128
          %s387 = scalar_lea.hbm %s1, %s386
          %s388 = sshll.u32 %s381, 4
          %s389 = int_to_ptr.vmem [resolvable:$true] %s388
          %394 = dma.hbm_to_vmem [thread:$0]  %s387, 256, %s389, %s378, 128, 128, 8
        $region52: #{tpu_custom_call.1} parent=43 // pred_fallthru
          _
      $region44: #{tpu_custom_call.1} parent=5 // pred_fallthru
        _
      %p395 = scmp.le.s32.totalorder 1, %s25
      %p396 = scmp.lt.s32.totalorder %s25, 3
      %p397 = pnand %p395, %p396
      %p398 = pneg %p397
      // Predicated region
      $region53: #{tpu_custom_call.1} parent=5 // pred_check
        _
      $region54: #{tpu_custom_call.1} parent=5 // pred_check_branch
        %400 = sbr.rel (%p397) target = $region56
      $region55: #{tpu_custom_call.1} parent=5 // pred_region
        %s401 = ssub.s32 %s25, 1
        %s402 = sand.u32 %s50, 1
        %s403 = scalar_lea.sflag [#allocation5], %s402
        %s404 = sand.u32 %s50, 1
        %s405 = smul.addr %s404, 8
        %s406 = scalar_lea.vmem [#allocation4], %s405
        // Predicated region
        $region57: #{tpu_custom_call.1} parent=55 // pred_check
          %p407 = pneg %p63
        $region58: #{tpu_custom_call.1} parent=55 // pred_check_branch
          %409 = sbr.rel (%p407) target = $region60
        $region59: #{tpu_custom_call.1} parent=55 // pred_region
          %410 = dma.done %s403, 128
        $region60: #{tpu_custom_call.1} parent=55 // pred_fallthru
          _
        %s411 = sand.u32 %s30, 1
        %s412 = scalar_lea.sflag [#allocation8], %s411
        %s413 = sand.u32 %s76, 1
        %s414 = smul.addr %s413, 16
        %s415 = scalar_lea.vmem [#allocation7], %s414
        // Predicated region
        $region61: #{tpu_custom_call.1} parent=55 // pred_check
          %p416 = pneg %p89
        $region62: #{tpu_custom_call.1} parent=55 // pred_check_branch
          %418 = sbr.rel (%p416) target = $region64
        $region63: #{tpu_custom_call.1} parent=55 // pred_region
          %419 = dma.done %s412, 256
        $region64: #{tpu_custom_call.1} parent=55 // pred_fallthru
          _
        // Predicated region
        $region65: #{tpu_custom_call.1} parent=55 // pred_check
          %p420 = pneg %p157
        $region66: #{tpu_custom_call.1} parent=55 // pred_check_branch
          %422 = sbr.rel (%p420) target = $region68
        $region67: #{tpu_custom_call.1} parent=55 // pred_region
          %423 = dma.done [#allocation8], 256
        $region68: #{tpu_custom_call.1} parent=55 // pred_fallthru
          _
        // Predicated region
        $region69: #{tpu_custom_call.1} parent=55 // pred_check
          %p424 = pneg %p235
        $region70: #{tpu_custom_call.1} parent=55 // pred_check_branch
          %426 = sbr.rel (%p424) target = $region72
        $region71: #{tpu_custom_call.1} parent=55 // pred_region
          %427 = dma.done [#allocation11], 256
        $region72: #{tpu_custom_call.1} parent=55 // pred_fallthru
          _
        %s428 = sand.u32 %s50, 1
        %s429 = scalar_lea.sflag [#allocation5], %s428
        %s430 = sand.u32 %s50, 1
        %s431 = smul.addr %s430, 8
        %s432 = scalar_lea.vmem [#allocation4], %s431
        %p433 = pneg %p63
        %p434 = pneg %p60
        %s435 = sand.u32 %s30, 1
        %s436 = scalar_lea.sflag [#allocation8], %s435
        %s437 = sand.u32 %s76, 1
        %s438 = smul.addr %s437, 16
        %s439 = scalar_lea.vmem [#allocation7], %s438
        %p440 = pneg %p89
        %p441 = pneg %p86
        %p442 = pneg %p110
        %p443 = pneg %p107
        %p444 = pneg %p131
        %p445 = pneg %p128
        %p446 = pneg %p157
        %p447 = pneg %p154
        %p448 = scmp.lt.s32.totalorder %s35, 0
        %s449 = scalar_select %p448, %s35, 0
        %s450 = smul.addr %s449, 4
        %s451 = smul.addr %s450, 4
        %s452 = scalar_lea.vmem %s5, %s451
        %p453 = pneg %p183
        %p454 = pneg %p180
        %p455 = scmp.lt.s32.totalorder %s35, 0
        %s456 = scalar_select %p455, %s35, 0
        %s457 = scalar_lea.vmem %s6, %s456
        %p458 = pneg %p209
        %p459 = pneg %p206
        %p460 = pneg %p235
        %p461 = pneg %p232
        %p462 = pneg %p256
        %p463 = pneg %p253
        %p464 = pneg %p282
        %p465 = pneg %p279
        %s466 = sand.u32 %s269, 1
        %s467 = scalar_lea.sflag [#allocation6], %s466
        %s468 = sand.u32 %s269, 1
        %s469 = smul.addr %s468, 8
        %s470 = scalar_lea.vmem [#allocation12], %s469
        %p471 = scmp.lt.s32.totalorder %s35, 0
        %s472 = scalar_select %p471, %s35, 0
        %s473 = smul.addr %s472, 4
        %s474 = smul.addr %s473, 4
        %s475 = scalar_lea.vmem %s5, %s474
        %p476 = scmp.lt.s32.totalorder %s35, 0
        %s477 = scalar_select %p476, %s35, 0
        %s478 = scalar_lea.vmem %s6, %s477
        %p480 = scmp.eq.s32.totalorder %s35, 0
        // Predicated region
        $region73: #{tpu_custom_call.1} parent=55 // pred_check
          %p481 = pneg %p480
        $region74: #{tpu_custom_call.1} parent=55 // pred_check_branch
          %483 = sbr.rel (%p481) target = $region76
        $region75: #{tpu_custom_call.1} parent=55 // pred_region
          %v484 = vld [vmem:[%s2] sm:$0x1]
          %v485 = vld [vmem:[%s3] sm:$0x1]
          %v486 = vld [vmem:[%s406] sm:$0xff]
          %vm487 = vcmask 261120
          %v488 = vsel %vm487, %v486, 0.0
          %489 = vadd.xlane.f32.xlu0 %v488
          %v490 = vpop.xlane.xlu0 %489
          %v491 = vrcp.pop 32.0
          %v492 = vmul.f32 %v490, %v491
          %v493 = vsub.f32 %v486, %v492
          %v494 = vmul.f32 %v493, %v493
          %v495 = vsel %vm487, %v494, 0.0
          %496 = vadd.xlane.f32.xlu0 %v495
          %v497 = vpop.xlane.xlu0 %496
          %v498 = vmul.f32 %v497, %v491
          %v499 = vadd.f32 %v498, 1e-06
          %v500 = vrsqrt.pop %v499
          %v501 = vmul.f32 %v493, %v500
          %v503 = vlaneseq
          %v504 = vshrl.u32 %v503, 7
          %v505 = vsub.s32 0, %v504
          %v506 = vrot.slane %v484, %v505
          %v508 = vmul.f32 %v501, %v506
          %v510 = vlaneseq
          %v511 = vshrl.u32 %v510, 7
          %v512 = vsub.s32 0, %v511
          %v513 = vrot.slane %v485, %v512
          %v515 = vadd.f32 %v508, %v513
          %v516 = vpack.c.bf16 %v515, %v515
          %vm517 = vcmask 257024
          %518 = vst.msk [vmem:[#allocation2] sm:$0xf] %vm517, %v516
          %v519 = vld [vmem:[%s415] sm:$0xff]
          %v520 = vld [vmem:[%s415 + $0x8] sm:$0xff]
          %v521 = vsel %vm487, %v519, 0.0
          %522 = vadd.xlane.f32.xlu0 %v521
          %v523 = vpop.xlane.xlu0 %522
          %v524 = vsel %vm487, %v520, 0.0
          %525 = vadd.xlane.f32.xlu0 %v524
          %v526 = vpop.xlane.xlu0 %525
          %v527 = vmul.f32 %v523, %v491
          %v528 = vmul.f32 %v526, %v491
          %v529 = vsub.f32 %v519, %v527
          %v530 = vsub.f32 %v520, %v528
          %v531 = vmul.f32 %v529, %v529
          %v532 = vmul.f32 %v530, %v530
          %v533 = vsel %vm487, %v531, 0.0
          %534 = vadd.xlane.f32.xlu0 %v533
          %v535 = vpop.xlane.xlu0 %534
          %v536 = vsel %vm487, %v532, 0.0
          %537 = vadd.xlane.f32.xlu0 %v536
          %v538 = vpop.xlane.xlu0 %537
          %v539 = vmul.f32 %v535, %v491
          %v540 = vmul.f32 %v538, %v491
          %v541 = vadd.f32 %v539, 1e-06
          %v542 = vadd.f32 %v540, 1e-06
          %v543 = vrsqrt.pop %v541
          %v544 = vrsqrt.pop %v542
          %v545 = vmul.f32 %v529, %v543
          %v546 = vmul.f32 %v530, %v544
          %v547 = vmul.f32 %v545, %v506
          %v548 = vmul.f32 %v546, %v506
          %v549 = vadd.f32 %v547, %v513
          %v550 = vadd.f32 %v548, %v513
          %v551 = vpack.c.bf16 %v550, %v549
          %552 = vst.msk [vmem:[#allocation3] sm:$0xff] %vm487, %v551
        $region76: #{tpu_custom_call.1} parent=55 // pred_fallthru
          _
        %v553 = vld [vmem:[#allocation2] sm:$0xf]
        %v554 = vld [vmem:[#allocation3] sm:$0xff]
        %v555 = vld [vmem:[#allocation9] sm:$0xf]
        %v556 = vld [vmem:[#allocation9 + $0x4] sm:$0xf]
        %v557 = vld [vmem:[#allocation9 + $0x8] sm:$0xf]
        %v558 = vld [vmem:[#allocation9 + $0xc] sm:$0xf]
        %v563 = vunpack.c.l.b16 %v555
        %v564 = vunpack.c.l.b16 %v556
        %v565 = vunpack.c.l.b16 %v557
        %v566 = vunpack.c.l.b16 %v558
        %v567 = vpack.c.b16 %v564, %v563
        %v568 = vpack.c.b16 %v566, %v565
        %vm571 = vcmask 261120
        %v573 = vsel %vm571, %v553, 0
        %575 = vmatprep.subr.bf16.mxu0 0
        %576 = vmatpush1.bf16.msra.mxu0 %v567
        %577 = vmatprep.subr.bf16.mxu0 0
        %578 = vmatpush1.bf16.msra.mxu0 %v568
        %579 = vmatprep.subr.bf16.mxu0 0
        %580 = vmatpush1.bf16.msra.mxu0 0
        %581 = vmatprep.subr.bf16.mxu0 0
        %582 = vmatpush1.bf16.msra.mxu0 0
        %583 = vmatprep.subr.bf16.mxu0 0
        %584 = vmatpush1.bf16.msra.mxu0 0
        %585 = vmatprep.subr.bf16.mxu0 0
        %586 = vmatpush1.bf16.msra.mxu0 0
        %587 = vmatprep.subr.bf16.mxu0 0
        %588 = vmatpush1.bf16.msra.mxu0 0
        %589 = vmatprep.subr.bf16.mxu0 0
        %590 = vmatpush1.bf16.msra.mxu0 0
        %591 = vmatprep.subr.bf16.mxu0 0
        %592 = vmatpush1.bf16.msra.mxu0 0
        %593 = vmatprep.subr.bf16.mxu0 0
        %594 = vmatpush1.bf16.msra.mxu0 0
        %595 = vmatprep.subr.bf16.mxu0 0
        %596 = vmatpush1.bf16.msra.mxu0 0
        %597 = vmatprep.subr.bf16.mxu0 0
        %598 = vmatpush1.bf16.msra.mxu0 0
        %599 = vmatprep.subr.bf16.mxu0 0
        %600 = vmatpush1.bf16.msra.mxu0 0
        %601 = vmatprep.subr.bf16.mxu0 0
        %602 = vmatpush1.bf16.msra.mxu0 0
        %603 = vmatprep.subr.bf16.mxu0 0
        %604 = vmatpush1.bf16.msra.mxu0 0
        %605 = vmatprep.subr.bf16.mxu0 0
        %606 = vmatpush1.bf16.msra.mxu0 0
        %607 = vmatprep.mubr.bf16.mxu0 0
        %608 = vmatmul.mubr.bf16.gmra.mrb[0].mxu0 %v573
        %v609 = vpop.f32.mrb[0].mxu0
        %v610 = vadd.f32 0.0, %v609
        %v611 = vpop.f32.mrb[0].mxu0
        %v612 = vpop.f32.mrb[0].mxu0
        %v613 = vpop.f32.mrb[0].mxu0
        %614 = vdwg.mxu0
        %v615 = vld [vmem:[%s475] sm:$0xf]
        %v616 = vld [vmem:[%s475 + $0x4] sm:$0xf]
        %v617 = vld [vmem:[%s475 + $0x8] sm:$0xf]
        %v618 = vld [vmem:[%s475 + $0xc] sm:$0xf]
        %v623 = vunpack.c.l.b16 %v615
        %v624 = vunpack.c.l.b16 %v616
        %v625 = vunpack.c.l.b16 %v617
        %v626 = vunpack.c.l.b16 %v618
        %v627 = vpack.c.b16 %v624, %v623
        %v628 = vpack.c.b16 %v626, %v625
        %v632 = vsel %vm571, %v554, 0
        %634 = vmatprep.subr.bf16.mxu0 0
        %635 = vmatpush1.bf16.msra.mxu0 %v627
        %636 = vmatprep.subr.bf16.mxu0 0
        %637 = vmatpush1.bf16.msra.mxu0 %v628
        %638 = vmatprep.subr.bf16.mxu0 0
        %639 = vmatpush1.bf16.msra.mxu0 0
        %640 = vmatprep.subr.bf16.mxu0 0
        %641 = vmatpush1.bf16.msra.mxu0 0
        %642 = vmatprep.subr.bf16.mxu0 0
        %643 = vmatpush1.bf16.msra.mxu0 0
        %644 = vmatprep.subr.bf16.mxu0 0
        %645 = vmatpush1.bf16.msra.mxu0 0
        %646 = vmatprep.subr.bf16.mxu0 0
        %647 = vmatpush1.bf16.msra.mxu0 0
        %648 = vmatprep.subr.bf16.mxu0 0
        %649 = vmatpush1.bf16.msra.mxu0 0
        %650 = vmatprep.subr.bf16.mxu0 0
        %651 = vmatpush1.bf16.msra.mxu0 0
        %652 = vmatprep.subr.bf16.mxu0 0
        %653 = vmatpush1.bf16.msra.mxu0 0
        %654 = vmatprep.subr.bf16.mxu0 0
        %655 = vmatpush1.bf16.msra.mxu0 0
        %656 = vmatprep.subr.bf16.mxu0 0
        %657 = vmatpush1.bf16.msra.mxu0 0
        %658 = vmatprep.subr.bf16.mxu0 0
        %659 = vmatpush1.bf16.msra.mxu0 0
        %660 = vmatprep.subr.bf16.mxu0 0
        %661 = vmatpush1.bf16.msra.mxu0 0
        %662 = vmatprep.subr.bf16.mxu0 0
        %663 = vmatpush1.bf16.msra.mxu0 0
        %664 = vmatprep.subr.bf16.mxu0 0
        %665 = vmatpush1.bf16.msra.mxu0 0
        %666 = vmatprep.mubr.bf16.mxu0 0
        %667 = vmatmul.mubr.bf16.gmra.mrb[0].mxu0 %v632
        %v668 = vpop.f32.mrb[0].mxu0
        %v669 = vadd.f32 0.0, %v668
        %v670 = vpop.f32.mrb[0].mxu0
        %v671 = vpop.f32.mrb[0].mxu0
        %v672 = vadd.f32 0.0, %v671
        %v673 = vpop.f32.mrb[0].mxu0
        %674 = vdwg.mxu0
        %v675 = vpack.c.bf16 %v610, %v610
        %v676 = vld [vmem:[%s478] sm:$0x1]
        %v678 = vlaneseq
        %v679 = vshrl.u32 %v678, 7
        %v680 = vsub.s32 0, %v679
        %v681 = vrot.slane %v676, %v680
        %682 = vrot.lane.b32.xlu0 %v681, 32
        %v683 = vpop.permute.xlu0 %682
        %v685 = vadd.f32 %v610, %v683
        %v686 = vxor.u32 %v685, 2147483648
        %v687 = vmul.f32 %v686, 1.442695
        %v688 = vpow.pop %v687
        %v689 = vadd.f32 %v688, 1.0
        %v690 = vrcp.pop %v689
        %v691 = vmul.f32 1.0, %v690
        %v692 = vpack.c.bf16 %v672, %v669
        %vm693 = vcmask 64512
        %v695 = vsel %vm693, %v675, 0
        %v698 = vsel %vm693, %v692, 0
        %700 = vmatprep.subr.bf16.mxu0 0
        %701 = vmatpush1.bf16.xpose.msra.mxu0 %v698
        %702 = vmatprep.subr.bf16.mxu0 0
        %703 = vmatpush1.bf16.xpose.msra.mxu0 0
        %704 = vmatprep.subr.bf16.mxu0 0
        %705 = vmatpush1.bf16.xpose.msra.mxu0 0
        %706 = vmatprep.subr.bf16.mxu0 0
        %707 = vmatpush1.bf16.xpose.msra.mxu0 0
        %708 = vmatprep.subr.bf16.mxu0 0
        %709 = vmatpush1.bf16.xpose.msra.mxu0 0
        %710 = vmatprep.subr.bf16.mxu0 0
        %711 = vmatpush1.bf16.xpose.msra.mxu0 0
        %712 = vmatprep.subr.bf16.mxu0 0
        %713 = vmatpush1.bf16.xpose.msra.mxu0 0
        %714 = vmatprep.subr.bf16.mxu0 0
        %715 = vmatpush1.bf16.xpose.msra.mxu0 0
        %716 = vmatprep.subr.bf16.mxu0 0
        %717 = vmatpush1.bf16.xpose.msra.mxu0 0
        %718 = vmatprep.subr.bf16.mxu0 0
        %719 = vmatpush1.bf16.xpose.msra.mxu0 0
        %720 = vmatprep.subr.bf16.mxu0 0
        %721 = vmatpush1.bf16.xpose.msra.mxu0 0
        %722 = vmatprep.subr.bf16.mxu0 0
        %723 = vmatpush1.bf16.xpose.msra.mxu0 0
        %724 = vmatprep.subr.bf16.mxu0 0
        %725 = vmatpush1.bf16.xpose.msra.mxu0 0
        %726 = vmatprep.subr.bf16.mxu0 0
        %727 = vmatpush1.bf16.xpose.msra.mxu0 0
        %728 = vmatprep.subr.bf16.mxu0 0
        %729 = vmatpush1.bf16.xpose.msra.mxu0 0
        %730 = vmatprep.subr.bf16.mxu0 0
        %731 = vmatpush1.bf16.xpose.msra.mxu0 0
        %732 = vmatprep.mubr.bf16.mxu0 0
        %733 = vmatmul.mubr.bf16.gmra.mrb[0].mxu0 %v695
        %v734 = vpop.f32.mrb[0].mxu0
        %v735 = vadd.f32 0.0, %v734
        %v736 = vpop.f32.mrb[0].mxu0
        %v737 = vpop.f32.mrb[0].mxu0
        %v738 = vpop.f32.mrb[0].mxu0
        %739 = vdwg.mxu0
        %vm740 = vcmask 130048
        %v741 = vsel %vm740, %v735, -inf
        %742 = vmax.xlane.f32.xlu0 %v741
        %v743 = vpop.xlane.xlu0 %742
        %v744 = vrot.slane %v741, 4
        %v745 = vmax.f32 %v741, %v744
        %v746 = vrot.slane %v745, 2
        %v747 = vmax.f32 %v745, %v746
        %v748 = vrot.slane %v747, 1
        %v749 = vmax.f32 %v747, %v748
        %v750 = vsub.f32 %v735, %v743
        %v751 = vmul.f32 %v750, 1.442695
        %v752 = vpow.pop %v751
        %v753 = vsub.f32 %v735, %v749
        %v754 = vmul.f32 %v753, 1.442695
        %v755 = vpow.pop %v754
        %v756 = vsel %vm740, %v752, 0.0
        %757 = vadd.xlane.f32.xlu0 %v756
        %v758 = vpop.xlane.xlu0 %757
        %v759 = vrcp.pop %v758
        %v760 = vsel %vm740, %v755, 0.0
        %v761 = vrot.slane %v760, 4
        %v762 = vadd.f32 %v760, %v761
        %v763 = vrot.slane %v762, 2
        %v764 = vadd.f32 %v762, %v763
        %v765 = vrot.slane %v764, 1
        %v766 = vadd.f32 %v764, %v765
        %v767 = vrcp.pop %v766
        %v768 = vmul.f32 %v752, %v759
        %v769 = vmul.f32 %v755, %v767
        %v770 = vmul.f32 %v768, %v769
        %v771 = vpack.c.bf16 %v770, %v770
        %773 = vrot.lane.b32.xlu0 %v692, 96
        %v774 = vpop.permute.xlu0 %773
        %v777 = vsel %vm740, %v771, 0
        %779 = vmatprep.subr.bf16.mxu0 0
        %780 = vmatpush1.bf16.msra.mxu0 %v774
        %781 = vmatprep.subr.bf16.mxu0 0
        %782 = vmatpush1.bf16.msra.mxu0 0
        %783 = vmatprep.subr.bf16.mxu0 0
        %784 = vmatpush1.bf16.msra.mxu0 0
        %785 = vmatprep.subr.bf16.mxu0 0
        %786 = vmatpush1.bf16.msra.mxu0 0
        %787 = vmatprep.subr.bf16.mxu0 0
        %788 = vmatpush1.bf16.msra.mxu0 0
        %789 = vmatprep.subr.bf16.mxu0 0
        %790 = vmatpush1.bf16.msra.mxu0 0
        %791 = vmatprep.subr.bf16.mxu0 0
        %792 = vmatpush1.bf16.msra.mxu0 0
        %793 = vmatprep.subr.bf16.mxu0 0
        %794 = vmatpush1.bf16.msra.mxu0 0
        %795 = vmatprep.subr.bf16.mxu0 0
        %796 = vmatpush1.bf16.msra.mxu0 0
        %797 = vmatprep.subr.bf16.mxu0 0
        %798 = vmatpush1.bf16.msra.mxu0 0
        %799 = vmatprep.subr.bf16.mxu0 0
        %800 = vmatpush1.bf16.msra.mxu0 0
        %801 = vmatprep.subr.bf16.mxu0 0
        %802 = vmatpush1.bf16.msra.mxu0 0
        %803 = vmatprep.subr.bf16.mxu0 0
        %804 = vmatpush1.bf16.msra.mxu0 0
        %805 = vmatprep.subr.bf16.mxu0 0
        %806 = vmatpush1.bf16.msra.mxu0 0
        %807 = vmatprep.subr.bf16.mxu0 0
        %808 = vmatpush1.bf16.msra.mxu0 0
        %809 = vmatprep.subr.bf16.mxu0 0
        %810 = vmatpush1.bf16.msra.mxu0 0
        %811 = vmatprep.mubr.bf16.mxu0 0
        %812 = vmatmul.mubr.bf16.gmra.mrb[0].mxu0 %v777
        %v813 = vpop.f32.mrb[0].mxu0
        %v814 = vadd.f32 0.0, %v813
        %v815 = vpop.f32.mrb[0].mxu0
        %v816 = vpop.f32.mrb[0].mxu0
        %v817 = vpop.f32.mrb[0].mxu0
        %818 = vdwg.mxu0
        %820 = vrot.lane.b32.xlu0 %v675, 120
        %v821 = vpop.permute.xlu0 %820
        %822 = vrot.lane.b32.xlu0 %v692, 120
        %v823 = vpop.permute.xlu0 %822
        %v825 = vsel %vm693, %v821, 0
        %v828 = vsel %vm693, %v823, 0
        %830 = vmatprep.subr.bf16.mxu0 0
        %831 = vmatpush1.bf16.xpose.msra.mxu0 %v828
        %832 = vmatprep.subr.bf16.mxu0 0
        %833 = vmatpush1.bf16.xpose.msra.mxu0 0
        %834 = vmatprep.subr.bf16.mxu0 0
        %835 = vmatpush1.bf16.xpose.msra.mxu0 0
        %836 = vmatprep.subr.bf16.mxu0 0
        %837 = vmatpush1.bf16.xpose.msra.mxu0 0
        %838 = vmatprep.subr.bf16.mxu0 0
        %839 = vmatpush1.bf16.xpose.msra.mxu0 0
        %840 = vmatprep.subr.bf16.mxu0 0
        %841 = vmatpush1.bf16.xpose.msra.mxu0 0
        %842 = vmatprep.subr.bf16.mxu0 0
        %843 = vmatpush1.bf16.xpose.msra.mxu0 0
        %844 = vmatprep.subr.bf16.mxu0 0
        %845 = vmatpush1.bf16.xpose.msra.mxu0 0
        %846 = vmatprep.subr.bf16.mxu0 0
        %847 = vmatpush1.bf16.xpose.msra.mxu0 0
        %848 = vmatprep.subr.bf16.mxu0 0
        %849 = vmatpush1.bf16.xpose.msra.mxu0 0
        %850 = vmatprep.subr.bf16.mxu0 0
        %851 = vmatpush1.bf16.xpose.msra.mxu0 0
        %852 = vmatprep.subr.bf16.mxu0 0
        %853 = vmatpush1.bf16.xpose.msra.mxu0 0
        %854 = vmatprep.subr.bf16.mxu0 0
        %855 = vmatpush1.bf16.xpose.msra.mxu0 0
        %856 = vmatprep.subr.bf16.mxu0 0
        %857 = vmatpush1.bf16.xpose.msra.mxu0 0
        %858 = vmatprep.subr.bf16.mxu0 0
        %859 = vmatpush1.bf16.xpose.msra.mxu0 0
        %860 = vmatprep.subr.bf16.mxu0 0
        %861 = vmatpush1.bf16.xpose.msra.mxu0 0
        %862 = vmatprep.mubr.bf16.mxu0 0
        %863 = vmatmul.mubr.bf16.gmra.mrb[0].mxu0 %v825
        %v864 = vpop.f32.mrb[0].mxu0
        %v865 = vadd.f32 0.0, %v864
        %v866 = vpop.f32.mrb[0].mxu0
        %v867 = vpop.f32.mrb[0].mxu0
        %v868 = vpop.f32.mrb[0].mxu0
        %869 = vdwg.mxu0
        %v870 = vsel %vm740, %v865, -inf
        %871 = vmax.xlane.f32.xlu0 %v870
        %v872 = vpop.xlane.xlu0 %871
        %v873 = vrot.slane %v870, 4
        %v874 = vmax.f32 %v870, %v873
        %v875 = vrot.slane %v874, 2
        %v876 = vmax.f32 %v874, %v875
        %v877 = vrot.slane %v876, 1
        %v878 = vmax.f32 %v876, %v877
        %v879 = vsub.f32 %v865, %v872
        %v880 = vmul.f32 %v879, 1.442695
        %v881 = vpow.pop %v880
        %v882 = vsub.f32 %v865, %v878
        %v883 = vmul.f32 %v882, 1.442695
        %v884 = vpow.pop %v883
        %v885 = vsel %vm740, %v881, 0.0
        %886 = vadd.xlane.f32.xlu0 %v885
        %v887 = vpop.xlane.xlu0 %886
        %v888 = vrcp.pop %v887
        %v889 = vsel %vm740, %v884, 0.0
        %v890 = vrot.slane %v889, 4
        %v891 = vadd.f32 %v889, %v890
        %v892 = vrot.slane %v891, 2
        %v893 = vadd.f32 %v891, %v892
        %v894 = vrot.slane %v893, 1
        %v895 = vadd.f32 %v893, %v894
        %v896 = vrcp.pop %v895
        %v897 = vmul.f32 %v881, %v888
        %v898 = vmul.f32 %v884, %v896
        %v899 = vmul.f32 %v897, %v898
        %v900 = vpack.c.bf16 %v899, %v899
        %901 = vrot.lane.b32.xlu0 %v692, 88
        %v902 = vpop.permute.xlu0 %901
        %v905 = vsel %vm740, %v900, 0
        %907 = vmatprep.subr.bf16.mxu0 0
        %908 = vmatpush1.bf16.msra.mxu0 %v902
        %909 = vmatprep.subr.bf16.mxu0 0
        %910 = vmatpush1.bf16.msra.mxu0 0
        %911 = vmatprep.subr.bf16.mxu0 0
        %912 = vmatpush1.bf16.msra.mxu0 0
        %913 = vmatprep.subr.bf16.mxu0 0
        %914 = vmatpush1.bf16.msra.mxu0 0
        %915 = vmatprep.subr.bf16.mxu0 0
        %916 = vmatpush1.bf16.msra.mxu0 0
        %917 = vmatprep.subr.bf16.mxu0 0
        %918 = vmatpush1.bf16.msra.mxu0 0
        %919 = vmatprep.subr.bf16.mxu0 0
        %920 = vmatpush1.bf16.msra.mxu0 0
        %921 = vmatprep.subr.bf16.mxu0 0
        %922 = vmatpush1.bf16.msra.mxu0 0
        %923 = vmatprep.subr.bf16.mxu0 0
        %924 = vmatpush1.bf16.msra.mxu0 0
        %925 = vmatprep.subr.bf16.mxu0 0
        %926 = vmatpush1.bf16.msra.mxu0 0
        %927 = vmatprep.subr.bf16.mxu0 0
        %928 = vmatpush1.bf16.msra.mxu0 0
        %929 = vmatprep.subr.bf16.mxu0 0
        %930 = vmatpush1.bf16.msra.mxu0 0
        %931 = vmatprep.subr.bf16.mxu0 0
        %932 = vmatpush1.bf16.msra.mxu0 0
        %933 = vmatprep.subr.bf16.mxu0 0
        %934 = vmatpush1.bf16.msra.mxu0 0
        %935 = vmatprep.subr.bf16.mxu0 0
        %936 = vmatpush1.bf16.msra.mxu0 0
        %937 = vmatprep.subr.bf16.mxu0 0
        %938 = vmatpush1.bf16.msra.mxu0 0
        %939 = vmatprep.mubr.bf16.mxu0 0
        %940 = vmatmul.mubr.bf16.gmra.mrb[0].mxu0 %v905
        %v941 = vpop.f32.mrb[0].mxu0
        %v942 = vadd.f32 0.0, %v941
        %v943 = vpop.f32.mrb[0].mxu0
        %v944 = vpop.f32.mrb[0].mxu0
        %v945 = vpop.f32.mrb[0].mxu0
        %946 = vdwg.mxu0
        %947 = vrot.lane.b32.xlu0 %v675, 112
        %v948 = vpop.permute.xlu0 %947
        %949 = vrot.lane.b32.xlu0 %v692, 112
        %v950 = vpop.permute.xlu0 %949
        %v952 = vsel %vm693, %v948, 0
        %v955 = vsel %vm693, %v950, 0
        %957 = vmatprep.subr.bf16.mxu0 0
        %958 = vmatpush1.bf16.xpose.msra.mxu0 %v955
        %959 = vmatprep.subr.bf16.mxu0 0
        %960 = vmatpush1.bf16.xpose.msra.mxu0 0
        %961 = vmatprep.subr.bf16.mxu0 0
        %962 = vmatpush1.bf16.xpose.msra.mxu0 0
        %963 = vmatprep.subr.bf16.mxu0 0
        %964 = vmatpush1.bf16.xpose.msra.mxu0 0
        %965 = vmatprep.subr.bf16.mxu0 0
        %966 = vmatpush1.bf16.xpose.msra.mxu0 0
        %967 = vmatprep.subr.bf16.mxu0 0
        %968 = vmatpush1.bf16.xpose.msra.mxu0 0
        %969 = vmatprep.subr.bf16.mxu0 0
        %970 = vmatpush1.bf16.xpose.msra.mxu0 0
        %971 = vmatprep.subr.bf16.mxu0 0
        %972 = vmatpush1.bf16.xpose.msra.mxu0 0
        %973 = vmatprep.subr.bf16.mxu0 0
        %974 = vmatpush1.bf16.xpose.msra.mxu0 0
        %975 = vmatprep.subr.bf16.mxu0 0
        %976 = vmatpush1.bf16.xpose.msra.mxu0 0
        %977 = vmatprep.subr.bf16.mxu0 0
        %978 = vmatpush1.bf16.xpose.msra.mxu0 0
        %979 = vmatprep.subr.bf16.mxu0 0
        %980 = vmatpush1.bf16.xpose.msra.mxu0 0
        %981 = vmatprep.subr.bf16.mxu0 0
        %982 = vmatpush1.bf16.xpose.msra.mxu0 0
        %983 = vmatprep.subr.bf16.mxu0 0
        %984 = vmatpush1.bf16.xpose.msra.mxu0 0
        %985 = vmatprep.subr.bf16.mxu0 0
        %986 = vmatpush1.bf16.xpose.msra.mxu0 0
        %987 = vmatprep.subr.bf16.mxu0 0
        %988 = vmatpush1.bf16.xpose.msra.mxu0 0
        %989 = vmatprep.mubr.bf16.mxu0 0
        %990 = vmatmul.mubr.bf16.gmra.mrb[0].mxu0 %v952
        %v991 = vpop.f32.mrb[0].mxu0
        %v992 = vadd.f32 0.0, %v991
        %v993 = vpop.f32.mrb[0].mxu0
        %v994 = vpop.f32.mrb[0].mxu0
        %v995 = vpop.f32.mrb[0].mxu0
        %996 = vdwg.mxu0
        %v997 = vsel %vm740, %v992, -inf
        %998 = vmax.xlane.f32.xlu0 %v997
        %v999 = vpop.xlane.xlu0 %998
        %v1000 = vrot.slane %v997, 4
        %v1001 = vmax.f32 %v997, %v1000
        %v1002 = vrot.slane %v1001, 2
        %v1003 = vmax.f32 %v1001, %v1002
        %v1004 = vrot.slane %v1003, 1
        %v1005 = vmax.f32 %v1003, %v1004
        %v1006 = vsub.f32 %v992, %v999
        %v1007 = vmul.f32 %v1006, 1.442695
        %v1008 = vpow.pop %v1007
        %v1009 = vsub.f32 %v992, %v1005
        %v1010 = vmul.f32 %v1009, 1.442695
        %v1011 = vpow.pop %v1010
        %v1012 = vsel %vm740, %v1008, 0.0
        %1013 = vadd.xlane.f32.xlu0 %v1012
        %v1014 = vpop.xlane.xlu0 %1013
        %v1015 = vrcp.pop %v1014
        %v1016 = vsel %vm740, %v1011, 0.0
        %v1017 = vrot.slane %v1016, 4
        %v1018 = vadd.f32 %v1016, %v1017
        %v1019 = vrot.slane %v1018, 2
        %v1020 = vadd.f32 %v1018, %v1019
        %v1021 = vrot.slane %v1020, 1
        %v1022 = vadd.f32 %v1020, %v1021
        %v1023 = vrcp.pop %v1022
        %v1024 = vmul.f32 %v1008, %v1015
        %v1025 = vmul.f32 %v1011, %v1023
        %v1026 = vmul.f32 %v1024, %v1025
        %v1027 = vpack.c.bf16 %v1026, %v1026
        %1028 = vrot.lane.b32.xlu0 %v692, 80
        %v1029 = vpop.permute.xlu0 %1028
        %v1032 = vsel %vm740, %v1027, 0
        %1034 = vmatprep.subr.bf16.mxu0 0
        %1035 = vmatpush1.bf16.msra.mxu0 %v1029
        %1036 = vmatprep.subr.bf16.mxu0 0
        %1037 = vmatpush1.bf16.msra.mxu0 0
        %1038 = vmatprep.subr.bf16.mxu0 0
        %1039 = vmatpush1.bf16.msra.mxu0 0
        %1040 = vmatprep.subr.bf16.mxu0 0
        %1041 = vmatpush1.bf16.msra.mxu0 0
        %1042 = vmatprep.subr.bf16.mxu0 0
        %1043 = vmatpush1.bf16.msra.mxu0 0
        %1044 = vmatprep.subr.bf16.mxu0 0
        %1045 = vmatpush1.bf16.msra.mxu0 0
        %1046 = vmatprep.subr.bf16.mxu0 0
        %1047 = vmatpush1.bf16.msra.mxu0 0
        %1048 = vmatprep.subr.bf16.mxu0 0
        %1049 = vmatpush1.bf16.msra.mxu0 0
        %1050 = vmatprep.subr.bf16.mxu0 0
        %1051 = vmatpush1.bf16.msra.mxu0 0
        %1052 = vmatprep.subr.bf16.mxu0 0
        %1053 = vmatpush1.bf16.msra.mxu0 0
        %1054 = vmatprep.subr.bf16.mxu0 0
        %1055 = vmatpush1.bf16.msra.mxu0 0
        %1056 = vmatprep.subr.bf16.mxu0 0
        %1057 = vmatpush1.bf16.msra.mxu0 0
        %1058 = vmatprep.subr.bf16.mxu0 0
        %1059 = vmatpush1.bf16.msra.mxu0 0
        %1060 = vmatprep.subr.bf16.mxu0 0
        %1061 = vmatpush1.bf16.msra.mxu0 0
        %1062 = vmatprep.subr.bf16.mxu0 0
        %1063 = vmatpush1.bf16.msra.mxu0 0
        %1064 = vmatprep.subr.bf16.mxu0 0
        %1065 = vmatpush1.bf16.msra.mxu0 0
        %1066 = vmatprep.mubr.bf16.mxu0 0
        %1067 = vmatmul.mubr.bf16.gmra.mrb[0].mxu0 %v1032
        %v1068 = vpop.f32.mrb[0].mxu0
        %v1069 = vadd.f32 0.0, %v1068
        %v1070 = vpop.f32.mrb[0].mxu0
        %v1071 = vpop.f32.mrb[0].mxu0
        %v1072 = vpop.f32.mrb[0].mxu0
        %1073 = vdwg.mxu0
        %1074 = vrot.lane.b32.xlu0 %v675, 104
        %v1075 = vpop.permute.xlu0 %1074
        %1076 = vrot.lane.b32.xlu0 %v692, 104
        %v1077 = vpop.permute.xlu0 %1076
        %v1079 = vsel %vm693, %v1075, 0
        %v1082 = vsel %vm693, %v1077, 0
        %1084 = vmatprep.subr.bf16.mxu0 0
        %1085 = vmatpush1.bf16.xpose.msra.mxu0 %v1082
        %1086 = vmatprep.subr.bf16.mxu0 0
        %1087 = vmatpush1.bf16.xpose.msra.mxu0 0
        %1088 = vmatprep.subr.bf16.mxu0 0
        %1089 = vmatpush1.bf16.xpose.msra.mxu0 0
        %1090 = vmatprep.subr.bf16.mxu0 0
        %1091 = vmatpush1.bf16.xpose.msra.mxu0 0
        %1092 = vmatprep.subr.bf16.mxu0 0
        %1093 = vmatpush1.bf16.xpose.msra.mxu0 0
        %1094 = vmatprep.subr.bf16.mxu0 0
        %1095 = vmatpush1.bf16.xpose.msra.mxu0 0
        %1096 = vmatprep.subr.bf16.mxu0 0
        %1097 = vmatpush1.bf16.xpose.msra.mxu0 0
        %1098 = vmatprep.subr.bf16.mxu0 0
        %1099 = vmatpush1.bf16.xpose.msra.mxu0 0
        %1100 = vmatprep.subr.bf16.mxu0 0
        %1101 = vmatpush1.bf16.xpose.msra.mxu0 0
        %1102 = vmatprep.subr.bf16.mxu0 0
        %1103 = vmatpush1.bf16.xpose.msra.mxu0 0
        %1104 = vmatprep.subr.bf16.mxu0 0
        %1105 = vmatpush1.bf16.xpose.msra.mxu0 0
        %1106 = vmatprep.subr.bf16.mxu0 0
        %1107 = vmatpush1.bf16.xpose.msra.mxu0 0
        %1108 = vmatprep.subr.bf16.mxu0 0
        %1109 = vmatpush1.bf16.xpose.msra.mxu0 0
        %1110 = vmatprep.subr.bf16.mxu0 0
        %1111 = vmatpush1.bf16.xpose.msra.mxu0 0
        %1112 = vmatprep.subr.bf16.mxu0 0
        %1113 = vmatpush1.bf16.xpose.msra.mxu0 0
        %1114 = vmatprep.subr.bf16.mxu0 0
        %1115 = vmatpush1.bf16.xpose.msra.mxu0 0
        %1116 = vmatprep.mubr.bf16.mxu0 0
        %1117 = vmatmul.mubr.bf16.gmra.mrb[0].mxu0 %v1079
        %v1118 = vpop.f32.mrb[0].mxu0
        %v1119 = vadd.f32 0.0, %v1118
        %v1120 = vpop.f32.mrb[0].mxu0
        %v1121 = vpop.f32.mrb[0].mxu0
        %v1122 = vpop.f32.mrb[0].mxu0
        %1123 = vdwg.mxu0
        %v1124 = vsel %vm740, %v1119, -inf
        %1125 = vmax.xlane.f32.xlu0 %v1124
        %v1126 = vpop.xlane.xlu0 %1125
        %v1127 = vrot.slane %v1124, 4
        %v1128 = vmax.f32 %v1124, %v1127
        %v1129 = vrot.slane %v1128, 2
        %v1130 = vmax.f32 %v1128, %v1129
        %v1131 = vrot.slane %v1130, 1
        %v1132 = vmax.f32 %v1130, %v1131
        %v1133 = vsub.f32 %v1119, %v1126
        %v1134 = vmul.f32 %v1133, 1.442695
        %v1135 = vpow.pop %v1134
        %v1136 = vsub.f32 %v1119, %v1132
        %v1137 = vmul.f32 %v1136, 1.442695
        %v1138 = vpow.pop %v1137
        %v1139 = vsel %vm740, %v1135, 0.0
        %1140 = vadd.xlane.f32.xlu0 %v1139
        %v1141 = vpop.xlane.xlu0 %1140
        %v1142 = vrcp.pop %v1141
        %v1143 = vsel %vm740, %v1138, 0.0
        %v1144 = vrot.slane %v1143, 4
        %v1145 = vadd.f32 %v1143, %v1144
        %v1146 = vrot.slane %v1145, 2
        %v1147 = vadd.f32 %v1145, %v1146
        %v1148 = vrot.slane %v1147, 1
        %v1149 = vadd.f32 %v1147, %v1148
        %v1150 = vrcp.pop %v1149
        %v1151 = vmul.f32 %v1135, %v1142
        %v1152 = vmul.f32 %v1138, %v1150
        %v1153 = vmul.f32 %v1151, %v1152
        %v1154 = vpack.c.bf16 %v1153, %v1153
        %1155 = vrot.lane.b32.xlu0 %v692, 72
        %v1156 = vpop.permute.xlu0 %1155
        %v1159 = vsel %vm740, %v1154, 0
        %1161 = vmatprep.subr.bf16.mxu0 0
        %1162 = vmatpush1.bf16.msra.mxu0 %v1156
        %1163 = vmatprep.subr.bf16.mxu0 0
        %1164 = vmatpush1.bf16.msra.mxu0 0
        %1165 = vmatprep.subr.bf16.mxu0 0
        %1166 = vmatpush1.bf16.msra.mxu0 0
        %1167 = vmatprep.subr.bf16.mxu0 0
        %1168 = vmatpush1.bf16.msra.mxu0 0
        %1169 = vmatprep.subr.bf16.mxu0 0
        %1170 = vmatpush1.bf16.msra.mxu0 0
        %1171 = vmatprep.subr.bf16.mxu0 0
        %1172 = vmatpush1.bf16.msra.mxu0 0
        %1173 = vmatprep.subr.bf16.mxu0 0
        %1174 = vmatpush1.bf16.msra.mxu0 0
        %1175 = vmatprep.subr.bf16.mxu0 0
        %1176 = vmatpush1.bf16.msra.mxu0 0
        %1177 = vmatprep.subr.bf16.mxu0 0
        %1178 = vmatpush1.bf16.msra.mxu0 0
        %1179 = vmatprep.subr.bf16.mxu0 0
        %1180 = vmatpush1.bf16.msra.mxu0 0
        %1181 = vmatprep.subr.bf16.mxu0 0
        %1182 = vmatpush1.bf16.msra.mxu0 0
        %1183 = vmatprep.subr.bf16.mxu0 0
        %1184 = vmatpush1.bf16.msra.mxu0 0
        %1185 = vmatprep.subr.bf16.mxu0 0
        %1186 = vmatpush1.bf16.msra.mxu0 0
        %1187 = vmatprep.subr.bf16.mxu0 0
        %1188 = vmatpush1.bf16.msra.mxu0 0
        %1189 = vmatprep.subr.bf16.mxu0 0
        %1190 = vmatpush1.bf16.msra.mxu0 0
        %1191 = vmatprep.subr.bf16.mxu0 0
        %1192 = vmatpush1.bf16.msra.mxu0 0
        %1193 = vmatprep.mubr.bf16.mxu0 0
        %1194 = vmatmul.mubr.bf16.gmra.mrb[0].mxu0 %v1159
        %v1195 = vpop.f32.mrb[0].mxu0
        %v1196 = vadd.f32 0.0, %v1195
        %v1197 = vpop.f32.mrb[0].mxu0
        %v1198 = vpop.f32.mrb[0].mxu0
        %v1199 = vpop.f32.mrb[0].mxu0
        %1200 = vdwg.mxu0
        %1202 = vrot.lane.b32.xlu0 %v942, 8
        %v1203 = vpop.permute.xlu0 %1202
        %1206 = vrot.lane.b32.xlu0 %v1069, 16
        %v1207 = vpop.permute.xlu0 %1206
        %1210 = vrot.lane.b32.xlu0 %v1196, 24
        %v1211 = vpop.permute.xlu0 %1210
        %v1213 = vsel %vm693, %v814, %v1203
        %v1214 = vsel %vm740, %v1213, %v1207
        %vm1215 = vcmask 195584
        %v1216 = vsel %vm1215, %v1214, %v1211
        %1218 = vrot.lane.b32.xlu0 %v691, 96
        %v1219 = vpop.permute.xlu0 %1218
        %v1221 = vmul.f32 %v1216, %v1219
        %v1222 = vpack.c.bf16 %v1221, %v1221
        %v1223 = vld [vmem:[#allocation10] sm:$0xf]
        %v1224 = vld [vmem:[#allocation10 + $0x4] sm:$0xf]
        %v1225 = vld [vmem:[#allocation10 + $0x8] sm:$0xf]
        %v1226 = vld [vmem:[#allocation10 + $0xc] sm:$0xf]
        %v1231 = vunpack.c.l.b16 %v1223
        %v1232 = vunpack.c.l.b16 %v1224
        %v1233 = vunpack.c.l.b16 %v1225
        %v1234 = vunpack.c.l.b16 %v1226
        %v1235 = vpack.c.b16 %v1232, %v1231
        %v1236 = vpack.c.b16 %v1234, %v1233
        %v1240 = vsel %vm571, %v1222, 0
        %1242 = vmatprep.subr.bf16.mxu0 0
        %1243 = vmatpush1.bf16.msra.mxu0 %v1235
        %1244 = vmatprep.subr.bf16.mxu0 0
        %1245 = vmatpush1.bf16.msra.mxu0 %v1236
        %1246 = vmatprep.subr.bf16.mxu0 0
        %1247 = vmatpush1.bf16.msra.mxu0 0
        %1248 = vmatprep.subr.bf16.mxu0 0
        %1249 = vmatpush1.bf16.msra.mxu0 0
        %1250 = vmatprep.subr.bf16.mxu0 0
        %1251 = vmatpush1.bf16.msra.mxu0 0
        %1252 = vmatprep.subr.bf16.mxu0 0
        %1253 = vmatpush1.bf16.msra.mxu0 0
        %1254 = vmatprep.subr.bf16.mxu0 0
        %1255 = vmatpush1.bf16.msra.mxu0 0
        %1256 = vmatprep.subr.bf16.mxu0 0
        %1257 = vmatpush1.bf16.msra.mxu0 0
        %1258 = vmatprep.subr.bf16.mxu0 0
        %1259 = vmatpush1.bf16.msra.mxu0 0
        %1260 = vmatprep.subr.bf16.mxu0 0
        %1261 = vmatpush1.bf16.msra.mxu0 0
        %1262 = vmatprep.subr.bf16.mxu0 0
        %1263 = vmatpush1.bf16.msra.mxu0 0
        %1264 = vmatprep.subr.bf16.mxu0 0
        %1265 = vmatpush1.bf16.msra.mxu0 0
        %1266 = vmatprep.subr.bf16.mxu0 0
        %1267 = vmatpush1.bf16.msra.mxu0 0
        %1268 = vmatprep.subr.bf16.mxu0 0
        %1269 = vmatpush1.bf16.msra.mxu0 0
        %1270 = vmatprep.subr.bf16.mxu0 0
        %1271 = vmatpush1.bf16.msra.mxu0 0
        %1272 = vmatprep.subr.bf16.mxu0 0
        %1273 = vmatpush1.bf16.msra.mxu0 0
        %1274 = vmatprep.mubr.bf16.mxu0 0
        %1275 = vmatmul.mubr.bf16.gmra.mrb[0].mxu0 %v1240
        %v1276 = vpop.f32.mrb[0].mxu0
        %v1277 = vadd.f32 0.0, %v1276
        %v1278 = vpop.f32.mrb[0].mxu0
        %v1279 = vpop.f32.mrb[0].mxu0
        %v1280 = vpop.f32.mrb[0].mxu0
        %1281 = vdwg.mxu0
        // Predicated region
        $region77: #{tpu_custom_call.1} parent=55 // pred_check
          %p1282 = pneg %p480
        $region78: #{tpu_custom_call.1} parent=55 // pred_check_branch
          %1284 = sbr.rel (%p1282) target = $region80
        $region79: #{tpu_custom_call.1} parent=55 // pred_region
          %v1285 = vld [vmem:[%s8] sm:$0x1]
          %v1287 = vlaneseq
          %v1288 = vshrl.u32 %v1287, 7
          %v1289 = vsub.s32 0, %v1288
          %v1290 = vrot.slane %v1285, %v1289
          %v1292 = vadd.f32 %v1277, %v1290
          %1293 = vst.msk [vmem:[%s470] sm:$0xff] %vm571, %v1292
        $region80: #{tpu_custom_call.1} parent=55 // pred_fallthru
          _
        %p1294 = scmp.gt.s32.totalorder %s35, 0
        // Predicated region
        $region81: #{tpu_custom_call.1} parent=55 // pred_check
          %p1295 = pneg %p1294
        $region82: #{tpu_custom_call.1} parent=55 // pred_check_branch
          %1297 = sbr.rel (%p1295) target = $region84
        $region83: #{tpu_custom_call.1} parent=55 // pred_region
          %v1298 = vld [vmem:[%s470] sm:$0xff]
          %v1299 = vadd.f32 %v1298, %v1277
          %1300 = vst.msk [vmem:[%s470] sm:$0xff] %vm571, %v1299
        $region84: #{tpu_custom_call.1} parent=55 // pred_fallthru
          _
        %s1301 = sand.u32 %s269, 1
        %s1302 = scalar_lea.sflag [#allocation6], %s1301
        %s1303 = sand.u32 %s269, 1
        %s1304 = smul.addr %s1303, 8
        %s1305 = scalar_lea.vmem [#allocation12], %s1304
        // Predicated region
        $region85: #{tpu_custom_call.1} parent=55 // pred_check
          %p1306 = pneg %p279
        $region86: #{tpu_custom_call.1} parent=55 // pred_check_branch
          %1308 = sbr.rel (%p1306) target = $region88
        $region87: #{tpu_custom_call.1} parent=55 // pred_region
          %s1310 = ssub.s32 128, 128
          %1311 = vsyncadd %s1302, %s1310
          %s1312 = smul.addr %s34, 128
          %s1313 = scalar_lea.hbm %s9, %s1312
          %s1315 = sshll.u32 %s1305, 4
          %s1316 = int_to_ptr.vmem [resolvable:$true] %s1315
          %1318 = dma.vmem_to_hbm [thread:$0]  %s1316, 128, %s1313, %s1302
        $region88: #{tpu_custom_call.1} parent=55 // pred_fallthru
          _
      $region56: #{tpu_custom_call.1} parent=5 // pred_fallthru
        _
      %p1319 = scmp.le.s32.totalorder 2, %s25
      // Predicated region
      $region89: #{tpu_custom_call.1} parent=5 // pred_check
        %p1320 = pneg %p1319
      $region90: #{tpu_custom_call.1} parent=5 // pred_check_branch
        %1322 = sbr.rel (%p1320) target = $region92
      $region91: #{tpu_custom_call.1} parent=5 // pred_region
        %s1323 = ssub.s32 %s25, 2
        // Predicated region
        $region93: #{tpu_custom_call.1} parent=91 // pred_check
          %p1324 = pneg %p285
        $region94: #{tpu_custom_call.1} parent=91 // pred_check_branch
          %1326 = sbr.rel (%p1324) target = $region96
        $region95: #{tpu_custom_call.1} parent=91 // pred_region
          %s1327 = sand.u32 %s270, 1
          %s1328 = scalar_lea.sflag [#allocation6], %s1327
          %s1329 = sand.u32 %s270, 1
          %s1330 = smul.addr %s1329, 8
          %s1331 = scalar_lea.vmem [#allocation12], %s1330
          %1332 = dma.done %s1328, 128
        $region96: #{tpu_custom_call.1} parent=91 // pred_fallthru
          _
      $region92: #{tpu_custom_call.1} parent=5 // pred_fallthru
        _
    $region6: #{tpu_custom_call.1} parent=1 // loop_footer
      %s29 = sadd.s32 1, %s25
    $region7: #{tpu_custom_call.1} parent=1 // loop_footer_branch
      %24 = sbr.rel target = $region3
    $region8: #{tpu_custom_call.1} parent=1 // loop_exit
      _
    %1333 = vsyncpa [#allocation5], 1
    %s1334 = scalar_lea.sflag [#allocation5], 1
    %1335 = vsyncpa %s1334, 1
    %1336 = vsyncpa [#allocation8], 1
    %s1337 = scalar_lea.sflag [#allocation8], 1
    %1338 = vsyncpa %s1337, 1
    %1339 = vsyncpa [#allocation11], 1
    %1340 = vsyncpa [#allocation6], 1
    %s1341 = scalar_lea.sflag [#allocation6], 1
    %1342 = vsyncpa %s1341, 1

</llo_original>
